<compile_context>
chip_gen: v7x
topology: tpu7x:2x2x1
jax: 0.10.0
libtpu: 0.0.40
codegen_flags: <defaults>
</compile_context>

<pallas_src>
import functools

import jax
import jax.numpy as jnp
from jax import lax
from jax.experimental import pallas as pl
from jax.experimental.pallas import tpu as pltpu


def _coral_kernel(fs_ref, ft_ref, out_ref, sum_s_ref, sum_t_ref, gram_ref, *,
                  batch, n_col_blocks, row_stripe, mask_rows):
    """One (feature-block, batch-tile) grid step.

    Scratch (per feature block, reset at the first batch step):
      sum_s_ref / sum_t_ref : (1, D) f32 per-feature sums
      gram_ref              : (D, col_tile) f32 signed Gram accumulator
                              Fs^T Fs - Ft^T Ft restricted to this column block
    """
    dj = pl.program_id(0)
    b = pl.program_id(1)
    nb = pl.num_programs(1)
    tb, d = fs_ref.shape
    col_tile = gram_ref.shape[1]
    dims0 = (((0,), (0,)), ((), ()))  # contract over the batch (row) axis

    @pl.when(b == 0)
    def _init():
        sum_s_ref[...] = jnp.zeros_like(sum_s_ref)
        sum_t_ref[...] = jnp.zeros_like(sum_t_ref)
        gram_ref[...] = jnp.zeros_like(gram_ref)

    fs = fs_ref[...]  # (tb, D), native dtype -> fast MXU path for bf16 inputs
    ft = ft_ref[...]

    keep = None
    if mask_rows:
        # Ragged last batch tile: rows past the true batch are undefined block
        # padding -> zero them (exact: zero rows contribute nothing below).
        valid = batch - b * tb
        keep = lax.broadcasted_iota(jnp.int32, (tb, 1), 0) < valid
        fs = jnp.where(keep, fs, jnp.zeros_like(fs))
        ft = jnp.where(keep, ft, jnp.zeros_like(ft))

    # Per-feature sums over valid rows, f32 accumulation (VPU; negligible vs MXU).
    sum_s_ref[...] += jnp.sum(fs, axis=0, keepdims=True, dtype=jnp.float32)
    sum_t_ref[...] += jnp.sum(ft, axis=0, keepdims=True, dtype=jnp.float32)

    # Column block of the RHS for this feature block (full width stays resident
    # as the LHS, so the column slice costs no extra HBM traffic).
    if n_col_blocks == 1:
        fs_c, ft_c = fs, ft
    else:
        col0 = pl.multiple_of(dj * col_tile, 128)
        fs_c = fs_ref[:, pl.ds(col0, col_tile)]
        ft_c = ft_ref[:, pl.ds(col0, col_tile)]
        if mask_rows:
            fs_c = jnp.where(keep, fs_c, jnp.zeros_like(fs_c))
            ft_c = jnp.where(keep, ft_c, jnp.zeros_like(ft_c))

    # Fused signed-concat matmul: [Fs;Ft]^T [Fs;-Ft] = Fs^T Fs - Ft^T Ft, one
    # in-place accumulator RMW per step.  Sublane-aligned concat only; tiny
    # unaligned batch tiles (B < ~8) fall back to two accumulating matmuls.
    itemsize = jnp.dtype(fs_ref.dtype).itemsize
    sublane_pack = 8 * max(1, 4 // itemsize)
    if tb % sublane_pack == 0:
        lhs = jnp.concatenate([fs, ft], axis=0)        # (2*tb, D)
        rhs = jnp.concatenate([fs_c, -ft_c], axis=0)   # (2*tb, col_tile)
        gram_ref[...] += lax.dot_general(
            lhs, rhs, dims0, preferred_element_type=jnp.float32)
    else:
        gram_ref[...] += lax.dot_general(
            fs, fs_c, dims0, preferred_element_type=jnp.float32)
        gram_ref[...] -= lax.dot_general(
            ft, ft_c, dims0, preferred_element_type=jnp.float32)

    @pl.when(b == nb - 1)
    def _finalize():
        bf = float(batch)
        inv_b = jnp.float32(1.0 / bf)

        if n_col_blocks == 1:
            ssum_c = sum_s_ref[...]
            tsum_c = sum_t_ref[...]
        else:
            col0 = pl.multiple_of(dj * col_tile, 128)
            ssum_c = sum_s_ref[:, pl.ds(col0, col_tile)]
            tsum_c = sum_t_ref[:, pl.ds(col0, col_tile)]

        # mean-diff contribution of this column block:
        #   sum_{d in block} (mean_s[d]-mean_t[d])^2 / D, with mean = sum / B.
        dsum_c = ssum_c - tsum_c
        mean_part = jnp.sum(dsum_c * dsum_c) * jnp.float32(1.0 / (bf * bf * float(d)))

        # cov_s - cov_t = (G - (S_s (x) S_s - S_t (x) S_t)/B) / (B - 1)
        # Streamed over row stripes of the Gram block; 1/(B-1)^2 and 1/D^2 are
        # deferred into the final scalar.
        def stripe_delta_sq(g, ssum_r, tsum_r):
            corr_s = lax.dot_general(ssum_r, ssum_c, dims0,
                                     preferred_element_type=jnp.float32)
            corr_t = lax.dot_general(tsum_r, tsum_c, dims0,
                                     preferred_element_type=jnp.float32)
            delta = g - (corr_s - corr_t) * inv_b
            return jnp.sum(delta * delta)

        n_stripes = d // row_stripe
        if n_stripes == 1:
            cov_sq = stripe_delta_sq(gram_ref[...], sum_s_ref[...], sum_t_ref[...])
        else:
            def body(s, acc):
                r0 = pl.multiple_of(s * row_stripe, 128)
                g = gram_ref[pl.ds(r0, row_stripe), :]
                ssum_r = sum_s_ref[:, pl.ds(r0, row_stripe)]
                tsum_r = sum_t_ref[:, pl.ds(r0, row_stripe)]
                return acc + stripe_delta_sq(g, ssum_r, tsum_r)

            cov_sq = lax.fori_loop(0, n_stripes, body, jnp.float32(0.0))

        denom = (bf - 1.0) ** 2 * float(d) * float(d)
        cov_part = cov_sq * jnp.float32(1.0 / denom)
        out_ref[...] = jnp.broadcast_to(mean_part + cov_part, out_ref.shape)


def _pick_tiles(batch, d, itemsize, vmem_cap):
    """Budget-driven (batch_tile, feature_tile, finalize_row_stripe)."""
    budget = int(vmem_cap * 0.7)

    # Feature-column tile: keep the f32 Gram accumulator within ~1/3 of budget.
    gram_budget = max(budget // 3, 4 << 20)
    if d * d * 4 <= gram_budget or d % 128 != 0:
        col_tile = d
    else:
        col_tile = 128
        for cand in (2048, 1024, 512, 256, 128):
            if d % cand == 0 and d * cand * 4 <= gram_budget:
                col_tile = cand
                break

    # Batch tile: double-buffered inputs + concat operands + masked copies.
    per_row = (8 * d + 4 * col_tile) * itemsize
    remaining = budget - 2 * d * col_tile * 4 - (2 << 20)
    tb_cap = remaining // per_row if per_row > 0 else 128
    tb_cap = int(min(max(tb_cap, 128), 1024))
    tb_cap = (tb_cap // 128) * 128
    tb = batch if batch <= tb_cap else tb_cap

    # Finalize row stripe (must divide D; >1 stripe only when 128-aligned).
    if d % 256 == 0:
        rs = 256
    elif d % 128 == 0:
        rs = 128
    else:
        rs = d
    return tb, col_tile, rs


def _vmem_limit_bytes(tb, col_tile, d, itemsize, rs, vmem_cap):
    bytes_inputs = 2 * 2 * tb * d * itemsize                 # 2 arrays x 2 bufs
    bytes_gram = 2 * d * col_tile * 4                        # acc + result staging
    bytes_interm = 2 * 2 * tb * (d + col_tile) * itemsize    # concats + masks/slices
    bytes_epi = 4 * rs * col_tile * 4                        # striped finalize temps
    need = bytes_inputs + bytes_gram + bytes_interm + bytes_epi + 2 * d * 4 + (2 << 20)
    return int(min(max(int(need * 1.2), 32 << 20), int(vmem_cap) - (4 << 20)))


def correlation_alignment_loss(f_s: jax.Array, f_t: jax.Array, *,
                               batch_tile=None, feature_tile=None) -> jax.Array:
    """Pallas implementation of CorrelationAlignmentLoss.forward.

    f_s, f_t: (batch, features) arrays (same shape/dtype). Returns a f32 scalar.
    """
    assert f_s.ndim == 2 and f_t.ndim == 2
    assert f_s.shape[1] == f_t.shape[1], "feature dims must match"
    assert f_s.shape[0] == f_t.shape[0], "batch sizes must match (see TODO)"
    b, d = f_s.shape
    assert b > 1, "CORAL divides by (batch - 1); need batch > 1"
    f_t = f_t.astype(f_s.dtype)
    itemsize = jnp.dtype(f_s.dtype).itemsize

    try:
        vmem_cap = int(pltpu.get_tpu_info().vmem_capacity_bytes)
    except Exception:
        vmem_cap = 64 << 20  # conservative fallback (v7x-sized)

    tb, col_tile, rs = _pick_tiles(b, d, itemsize, vmem_cap)
    if batch_tile is not None:
        tb = min(int(batch_tile), b)
        if tb < b and tb % 8 != 0:
            tb = max((tb // 8) * 8, 8)
    if feature_tile is not None:
        cand = int(feature_tile)
        if cand == d or (d % cand == 0 and cand % 128 == 0):
            col_tile = cand

    n_dj = d // col_tile
    n_b = pl.cdiv(b, tb)
    mask_rows = (b % tb) != 0

    kernel = functools.partial(
        _coral_kernel, batch=b, n_col_blocks=n_dj, row_stripe=rs,
        mask_rows=mask_rows)

    cost = pl.CostEstimate(
        flops=4 * b * d * d + 4 * d * d + 8 * b * d,
        transcendentals=0,
        bytes_accessed=2 * b * d * itemsize * n_dj + n_dj * 128 * 4,
    )

    out = pl.pallas_call(
        kernel,
        out_shape=jax.ShapeDtypeStruct((n_dj, 1, 128), jnp.float32),
        grid_spec=pltpu.PrefetchScalarGridSpec(
            num_scalar_prefetch=0,
            grid=(n_dj, n_b),            # feature blocks outer, batch innermost
            in_specs=[
                pl.BlockSpec((tb, d), lambda j, i: (i, 0)),
                pl.BlockSpec((tb, d), lambda j, i: (i, 0)),
            ],
            out_specs=pl.BlockSpec((1, 1, 128), lambda j, i: (j, 0, 0)),
            scratch_shapes=[
                pltpu.VMEM((1, d), jnp.float32),         # sum of f_s rows
                pltpu.VMEM((1, d), jnp.float32),         # sum of f_t rows
                pltpu.VMEM((d, col_tile), jnp.float32),  # signed Gram accumulator
            ],
        ),
        compiler_params=pltpu.CompilerParams(
            dimension_semantics=("parallel", "arbitrary"),
            vmem_limit_bytes=_vmem_limit_bytes(tb, col_tile, d, itemsize, rs, vmem_cap),
        ),
        cost_estimate=cost,
    )(f_s, f_t)

    # Each feature block wrote its partial loss broadcast over 128 lanes.
    return jnp.sum(out[:, 0, 0])


def _reference(f_s, f_t):
    """Pure-JAX reference mirroring the PyTorch module exactly (in f32)."""
    f_s = f_s.astype(jnp.float32)
    f_t = f_t.astype(jnp.float32)
    mean_s = f_s.mean(0, keepdims=True)
    mean_t = f_t.mean(0, keepdims=True)
    cent_s = f_s - mean_s
    cent_t = f_t - mean_t
    cov_s = cent_s.T @ cent_s / (f_s.shape[0] - 1)
    cov_t = cent_t.T @ cent_t / (f_t.shape[0] - 1)
    mean_diff = jnp.mean((mean_s - mean_t) ** 2)
    cov_diff = jnp.mean((cov_s - cov_t) ** 2)
    return mean_diff + cov_diff


if __name__ == "__main__":
    key = jax.random.PRNGKey(0)
    k_s, k_t = jax.random.split(key)

    # Config 1: exercises the full streaming machinery -- 3 feature blocks
    # (D=384, tile 128), 2 batch steps with a masked ragged tail (B=200,
    # tile 128), and a 3-stripe streamed finalize.
    B, D = 200, 384
    f_s = jax.random.normal(k_s, (B, D), dtype=jnp.float32)
    f_t = jax.random.normal(k_t, (B, D), dtype=jnp.float32) * 1.5 + 0.3

    loss = correlation_alignment_loss(f_s, f_t, batch_tile=128, feature_tile=128)
    jax.block_until_ready(loss)
    ref = _reference(f_s, f_t)
    assert jnp.allclose(loss, ref, rtol=5e-4, atol=1e-5), (loss, ref)

    # Config 2: default (automatic) tile selection -- single feature block,
    # single batch step, no masking.
    B2, D2 = 32, 96
    g_s = jax.random.normal(jax.random.PRNGKey(1), (B2, D2), dtype=jnp.float32) + 0.5
    g_t = jax.random.normal(jax.random.PRNGKey(2), (B2, D2), dtype=jnp.float32)
    loss2 = correlation_alignment_loss(g_s, g_t)
    jax.block_until_ready(loss2)
    ref2 = _reference(g_s, g_t)
    assert jnp.allclose(loss2, ref2, rtol=5e-4, atol=1e-5), (loss2, ref2)

    print("KERNEL_OK")
</pallas_src>

<mosaic_0001>
module attributes {stable_mosaic.version = 11 : i64} {
  func.func @_coral_kernel(%arg0: i32, %arg1: i32, %arg2: memref<128x384xf32, #tpu.memory_space<vmem>>, %arg3: memref<128x384xf32, #tpu.memory_space<vmem>>, %arg4: memref<1x1x128xf32, #tpu.memory_space<vmem>>, %arg5: memref<1x384xf32, #tpu.memory_space<vmem>>, %arg6: memref<1x384xf32, #tpu.memory_space<vmem>>, %arg7: memref<384x128xf32, #tpu.memory_space<vmem>>) attributes {dimension_semantics = [#tpu.dimension_semantics<parallel>, #tpu.dimension_semantics<arbitrary>], iteration_bounds = array<i64: 3, 2>, scalar_prefetch = 0 : i64, scratch_operands = 3 : i64, tpu.core_type = #tpu.core_type<tc>, window_params = [{transform_indices = @transform_0, window_bounds = array<i64: 128, 384>}, {transform_indices = @transform_1, window_bounds = array<i64: 128, 384>}, {transform_indices = @transform_2, window_bounds = array<i64: 1, 1, 128>}]} {
    %c0_i32 = arith.constant 0 : i32
    %0 = arith.cmpi eq, %arg1, %c0_i32 : i32
    %1 = arith.extui %0 : i1 to i32
    %c0_i32_0 = arith.constant 0 : i32
    %2 = arith.cmpi ne, %1, %c0_i32_0 : i32
    scf.if %2 {
      %cst_27 = arith.constant 0.000000e+00 : f32
      %53 = vector.broadcast %cst_27 : f32 to vector<1x384xf32>
      %c0_28 = arith.constant 0 : index
      %c0_29 = arith.constant 0 : index
      %54 = vector.load %arg5[%c0_28, %c0_29] : memref<1x384xf32, #tpu.memory_space<vmem>>, vector<1x384xf32>
      tpu.vector_store %arg5[%c0_28, %c0_29], %53 {strides = array<i32>} : memref<1x384xf32, #tpu.memory_space<vmem>>, vector<1x384xf32>,
      %cst_30 = arith.constant 0.000000e+00 : f32
      %55 = vector.broadcast %cst_30 : f32 to vector<1x384xf32>
      %c0_31 = arith.constant 0 : index
      %c0_32 = arith.constant 0 : index
      %56 = vector.load %arg6[%c0_31, %c0_32] : memref<1x384xf32, #tpu.memory_space<vmem>>, vector<1x384xf32>
      tpu.vector_store %arg6[%c0_31, %c0_32], %55 {strides = array<i32>} : memref<1x384xf32, #tpu.memory_space<vmem>>, vector<1x384xf32>,
      %cst_33 = arith.constant 0.000000e+00 : f32
      %57 = vector.broadcast %cst_33 : f32 to vector<384x128xf32>
      %c0_34 = arith.constant 0 : index
      %c0_35 = arith.constant 0 : index
      %58 = vector.load %arg7[%c0_34, %c0_35] : memref<384x128xf32, #tpu.memory_space<vmem>>, vector<384x128xf32>
      tpu.vector_store %arg7[%c0_34, %c0_35], %57 {strides = array<i32>} : memref<384x128xf32, #tpu.memory_space<vmem>>, vector<384x128xf32>,
    } else {
    }
    %c0 = arith.constant 0 : index
    %c0_1 = arith.constant 0 : index
    %3 = vector.load %arg2[%c0, %c0_1] : memref<128x384xf32, #tpu.memory_space<vmem>>, vector<128x384xf32>
    %c0_2 = arith.constant 0 : index
    %c0_3 = arith.constant 0 : index
    %4 = vector.load %arg3[%c0_2, %c0_3] : memref<128x384xf32, #tpu.memory_space<vmem>>, vector<128x384xf32>
    %c128_i32 = arith.constant 128 : i32
    %5 = arith.muli %arg1, %c128_i32 : i32
    %c200_i32 = arith.constant 200 : i32
    %6 = arith.subi %c200_i32, %5 : i32
    %7 = tpu.iota {dimensions = array<i32: 0>} : vector<128x1xi32>
    %8 = vector.broadcast %6 : i32 to vector<128x1xi32>
    %9 = arith.cmpi slt, %7, %8 : vector<128x1xi32>
    %cst = arith.constant 0.000000e+00 : f32
    %10 = vector.broadcast %cst : f32 to vector<128x384xf32>
    %11 = vector.shape_cast %9 : vector<128x1xi1> to vector<128x1xi1>
    %12 = vector.broadcast %11 : vector<128x1xi1> to vector<128x384xi1>
    %13 = arith.select %12, %3, %10 : vector<128x384xi1>, vector<128x384xf32>
    %cst_4 = arith.constant 0.000000e+00 : f32
    %14 = vector.broadcast %cst_4 : f32 to vector<128x384xf32>
    %15 = vector.shape_cast %9 : vector<128x1xi1> to vector<128x1xi1>
    %16 = vector.broadcast %15 : vector<128x1xi1> to vector<128x384xi1>
    %17 = arith.select %16, %4, %14 : vector<128x384xi1>, vector<128x384xf32>
    %c0_5 = arith.constant 0 : index
    %c0_6 = arith.constant 0 : index
    %18 = vector.load %arg5[%c0_5, %c0_6] : memref<1x384xf32, #tpu.memory_space<vmem>>, vector<1x384xf32>
    %cst_7 = arith.constant dense<0.000000e+00> : vector<384xf32>
    %19 = vector.multi_reduction <add>, %13, %cst_7 [0] : vector<128x384xf32> to vector<384xf32>
    %20 = vector.shape_cast %19 : vector<384xf32> to vector<1x384xf32>
    %21 = arith.addf %18, %20 : vector<1x384xf32>
    %c0_8 = arith.constant 0 : index
    %c0_9 = arith.constant 0 : index
    %22 = vector.load %arg5[%c0_8, %c0_9] : memref<1x384xf32, #tpu.memory_space<vmem>>, vector<1x384xf32>
    tpu.vector_store %arg5[%c0_8, %c0_9], %21 {strides = array<i32>} : memref<1x384xf32, #tpu.memory_space<vmem>>, vector<1x384xf32>,
    %c0_10 = arith.constant 0 : index
    %c0_11 = arith.constant 0 : index
    %23 = vector.load %arg6[%c0_10, %c0_11] : memref<1x384xf32, #tpu.memory_space<vmem>>, vector<1x384xf32>
    %cst_12 = arith.constant dense<0.000000e+00> : vector<384xf32>
    %24 = vector.multi_reduction <add>, %17, %cst_12 [0] : vector<128x384xf32> to vector<384xf32>
    %25 = vector.shape_cast %24 : vector<384xf32> to vector<1x384xf32>
    %26 = arith.addf %23, %25 : vector<1x384xf32>
    %c0_13 = arith.constant 0 : index
    %c0_14 = arith.constant 0 : index
    %27 = vector.load %arg6[%c0_13, %c0_14] : memref<1x384xf32, #tpu.memory_space<vmem>>, vector<1x384xf32>
    tpu.vector_store %arg6[%c0_13, %c0_14], %26 {strides = array<i32>} : memref<1x384xf32, #tpu.memory_space<vmem>>, vector<1x384xf32>,
    %c128_i32_15 = arith.constant 128 : i32
    %28 = arith.muli %arg0, %c128_i32_15 : i32
    %29 = tpu.assume_multiple %28, 128 : i32
    %c0_16 = arith.constant 0 : index
    %30 = arith.index_cast %29 : i32 to index
    %31 = vector.load %arg2[%c0_16, %30] : memref<128x384xf32, #tpu.memory_space<vmem>>, vector<128x128xf32>
    %c0_17 = arith.constant 0 : index
    %32 = arith.index_cast %29 : i32 to index
    %33 = vector.load %arg3[%c0_17, %32] : memref<128x384xf32, #tpu.memory_space<vmem>>, vector<128x128xf32>
    %cst_18 = arith.constant 0.000000e+00 : f32
    %34 = vector.broadcast %cst_18 : f32 to vector<128x128xf32>
    %35 = vector.shape_cast %9 : vector<128x1xi1> to vector<128x1xi1>
    %36 = vector.broadcast %35 : vector<128x1xi1> to vector<128x128xi1>
    %37 = arith.select %36, %31, %34 : vector<128x128xi1>, vector<128x128xf32>
    %cst_19 = arith.constant 0.000000e+00 : f32
    %38 = vector.broadcast %cst_19 : f32 to vector<128x128xf32>
    %39 = vector.shape_cast %9 : vector<128x1xi1> to vector<128x1xi1>
    %40 = vector.broadcast %39 : vector<128x1xi1> to vector<128x128xi1>
    %41 = arith.select %40, %33, %38 : vector<128x128xi1>, vector<128x128xf32>
    %42 = tpu.concatenate %13, %17 in 0 : vector<128x384xf32>, vector<128x384xf32> -> vector<256x384xf32>
    %cst_20 = arith.constant 0.000000e+00 : f32
    %43 = vector.broadcast %cst_20 : f32 to vector<128x128xf32>
    %44 = arith.subf %43, %41 : vector<128x128xf32>
    %45 = tpu.concatenate %37, %44 in 0 : vector<128x128xf32>, vector<128x128xf32> -> vector<256x128xf32>
    %c0_21 = arith.constant 0 : index
    %c0_22 = arith.constant 0 : index
    %46 = vector.load %arg7[%c0_21, %c0_22] : memref<384x128xf32, #tpu.memory_space<vmem>>, vector<384x128xf32>
    %cst_23 = arith.constant dense<0.000000e+00> : vector<384x128xf32>
    %47 = tpu.matmul %42, %45, %cst_23 {dimension_numbers = #tpu.dot_dimension_numbers<[0], [0], [1], [1], [0, 1, 1, 1], [], []>} : vector<256x384xf32>, vector<256x128xf32>, vector<384x128xf32> -> vector<384x128xf32>
    %48 = arith.addf %46, %47 : vector<384x128xf32>
    %c0_24 = arith.constant 0 : index
    %c0_25 = arith.constant 0 : index
    %49 = vector.load %arg7[%c0_24, %c0_25] : memref<384x128xf32, #tpu.memory_space<vmem>>, vector<384x128xf32>
    tpu.vector_store %arg7[%c0_24, %c0_25], %48 {strides = array<i32>} : memref<384x128xf32, #tpu.memory_space<vmem>>, vector<384x128xf32>,
    %c1_i32 = arith.constant 1 : i32
    %50 = arith.cmpi eq, %arg1, %c1_i32 : i32
    %51 = arith.extui %50 : i1 to i32
    %c0_i32_26 = arith.constant 0 : i32
    %52 = arith.cmpi ne, %51, %c0_i32_26 : i32
    scf.if %52 {
      %c128_i32_27 = arith.constant 128 : i32
      %53 = arith.muli %arg0, %c128_i32_27 : i32
      %54 = tpu.assume_multiple %53, 128 : i32
      %c0_28 = arith.constant 0 : index
      %55 = arith.index_cast %54 : i32 to index
      %56 = vector.load %arg5[%c0_28, %55] : memref<1x384xf32, #tpu.memory_space<vmem>>, vector<1x128xf32>
      %c0_29 = arith.constant 0 : index
      %57 = arith.index_cast %54 : i32 to index
      %58 = vector.load %arg6[%c0_29, %57] : memref<1x384xf32, #tpu.memory_space<vmem>>, vector<1x128xf32>
      %59 = arith.subf %56, %58 : vector<1x128xf32>
      %60 = arith.mulf %59, %59 : vector<1x128xf32>
      %61 = vector.shape_cast %60 : vector<1x128xf32> to vector<1x1x128xf32>
      %cst_30 = arith.constant dense<0.000000e+00> : vector<1xf32>
      %62 = vector.multi_reduction <add>, %61, %cst_30 [1, 2] : vector<1x1x128xf32> to vector<1xf32>
      %63 = vector.shape_cast %62 : vector<1xf32> to vector<1x1x1xf32>
      %64 = vector.extract %63[0, 0, 0] : f32 from vector<1x1x1xf32>
      %cst_31 = arith.constant 6.51041673E-8 : f32
      %65 = arith.mulf %64, %cst_31 : f32
      %cst_32 = arith.constant 5.000000e-03 : f32
      %cst_33 = arith.constant 0.000000e+00 : f32
      %c0_i32_34 = arith.constant 0 : i32
      %c3_i32 = arith.constant 3 : i32
      %66 = arith.addi %c0_i32_34, %c3_i32 : i32
      %c1_i32_35 = arith.constant 1 : i32
      %67 = scf.for %arg8 = %c0_i32_34 to %66 step %c1_i32_35 iter_args(%arg9 = %cst_33) -> (f32)  : i32 {
        %c128_i32_41 = arith.constant 128 : i32
        %72 = arith.muli %arg8, %c128_i32_41 : i32
        %73 = tpu.assume_multiple %72, 128 : i32
        %74 = arith.index_cast %73 : i32 to index
        %c0_42 = arith.constant 0 : index
        %75 = vector.load %arg7[%74, %c0_42] : memref<384x128xf32, #tpu.memory_space<vmem>>, vector<128x128xf32>
        %c0_43 = arith.constant 0 : index
        %76 = arith.index_cast %73 : i32 to index
        %77 = vector.load %arg5[%c0_43, %76] : memref<1x384xf32, #tpu.memory_space<vmem>>, vector<1x128xf32>
        %c0_44 = arith.constant 0 : index
        %78 = arith.index_cast %73 : i32 to index
        %79 = vector.load %arg6[%c0_44, %78] : memref<1x384xf32, #tpu.memory_space<vmem>>, vector<1x128xf32>
        %cst_45 = arith.constant dense<0.000000e+00> : vector<128x128xf32>
        %80 = tpu.matmul %77, %56, %cst_45 {dimension_numbers = #tpu.dot_dimension_numbers<[0], [0], [1], [1], [0, 1, 1, 1], [], []>} : vector<1x128xf32>, vector<1x128xf32>, vector<128x128xf32> -> vector<128x128xf32>
        %cst_46 = arith.constant dense<0.000000e+00> : vector<128x128xf32>
        %81 = tpu.matmul %79, %58, %cst_46 {dimension_numbers = #tpu.dot_dimension_numbers<[0], [0], [1], [1], [0, 1, 1, 1], [], []>} : vector<1x128xf32>, vector<1x128xf32>, vector<128x128xf32> -> vector<128x128xf32>
        %82 = arith.subf %80, %81 : vector<128x128xf32>
        %83 = vector.broadcast %cst_32 : f32 to vector<128x128xf32>
        %84 = arith.mulf %82, %83 : vector<128x128xf32>
        %85 = arith.subf %75, %84 : vector<128x128xf32>
        %86 = arith.mulf %85, %85 : vector<128x128xf32>
        %87 = vector.shape_cast %86 : vector<128x128xf32> to vector<1x128x128xf32>
        %cst_47 = arith.constant dense<0.000000e+00> : vector<1xf32>
        %88 = vector.multi_reduction <add>, %87, %cst_47 [1, 2] : vector<1x128x128xf32> to vector<1xf32>
        %89 = vector.shape_cast %88 : vector<1xf32> to vector<1x1x1xf32>
        %90 = vector.extract %89[0, 0, 0] : f32 from vector<1x1x1xf32>
        %91 = arith.addf %arg9, %90 : f32
        scf.yield %91 : f32
      }
      %c3_i32_36 = arith.constant 3 : i32
      %cst_37 = arith.constant 1.71250319E-10 : f32
      %68 = arith.mulf %67, %cst_37 : f32
      %69 = arith.addf %65, %68 : f32
      %70 = vector.broadcast %69 : f32 to vector<1x1x128xf32>
      %c0_38 = arith.constant 0 : index
      %c0_39 = arith.constant 0 : index
      %c0_40 = arith.constant 0 : index
      %71 = vector.load %arg4[%c0_38, %c0_39, %c0_40] : memref<1x1x128xf32, #tpu.memory_space<vmem>>, vector<1x1x128xf32>
      tpu.vector_store %arg4[%c0_38, %c0_39, %c0_40], %70 {strides = array<i32>} : memref<1x1x128xf32, #tpu.memory_space<vmem>>, vector<1x1x128xf32>,
    } else {
    }
    return
  }
  func.func @transform_0(%arg0: i32, %arg1: i32) -> (i32, i32) {
    %c0_i32 = arith.constant 0 : i32
    %c0_i32_0 = arith.constant 0 : i32
    return %arg1, %c0_i32 : i32, i32
  }
  func.func @transform_1(%arg0: i32, %arg1: i32) -> (i32, i32) {
    %c0_i32 = arith.constant 0 : i32
    %c0_i32_0 = arith.constant 0 : i32
    return %arg1, %c0_i32 : i32, i32
  }
  func.func @transform_2(%arg0: i32, %arg1: i32) -> (i32, i32, i32) {
    %c0_i32 = arith.constant 0 : i32
    %c0_i32_0 = arith.constant 0 : i32
    %c0_i32_1 = arith.constant 0 : i32
    return %arg0, %c0_i32, %c0_i32_0 : i32, i32, i32
  }
}

</mosaic_0001>

<llo_original>
// kernel: tpu_custom_call.1
$region0: #{tpu_custom_call.1}
  #allocation0 [shape = 'u32[]', space=smem, size = 0x4, offset = 0x4, fixed_abs, tag = 'smem constant byte address 0x4 - core index']
  #allocation1 [shape = 'u32[144,128]{1,0:T(1,128)}', space=vmem, size = 0x12000, scoped, tag = 'internal scratch']
  #allocation2 [shape = 'f32[1,384]{1,0:T(1,128)}', space=vmem, size = 0x600, scoped, tag = 'scratch operand']
  #allocation3 [shape = 'f32[1,384]{1,0:T(1,128)}', space=vmem, size = 0x600, scoped, tag = 'scratch operand']
  #allocation4 [shape = 'f32[384,128]{1,0:T(8,128)}', space=vmem, size = 0x30000, scoped, tag = 'scratch operand']
  %s0 = inlined_call_operand.hbm [shape: f32[200,384], index: 0, kind: input, shape index: {}]
  %s1 = inlined_call_operand.hbm [shape: f32[200,384], index: 1, kind: input, shape index: {}]
  %s2 = inlined_call_operand.hbm [shape: f32[3,1,128], index: 2, kind: output, shape index: {}]
  %s3 = sld [smem:[#allocation0]]
  $region64: #{tpu_custom_call.1} parent=0
    _
  %s5 = ssub.s32 1, %s3
  %s6 = scalar_select 0, %s5, %s3
  $region1: #{tpu_custom_call.1} parent=0
    #allocation5 [shape = 'u8[393216]{0}', space=vmem, size = 0x60000, scoped, tag = 'input window, operand 0']
    #allocation6 [shape = 's32[2]{0}', space=sflag, size = 0x8, scoped, tag = 'scoped memory for tpu_custom_call.1']
    #allocation7 [shape = 's32[2]{0}', space=sflag, size = 0x8, scoped, tag = 'scoped memory for tpu_custom_call.1']
    #allocation8 [shape = 'u8[393216]{0}', space=vmem, size = 0x60000, scoped, tag = 'input window, operand 1']
    #allocation9 [shape = 's32[2]{0}', space=sflag, size = 0x8, scoped, tag = 'scoped memory for tpu_custom_call.1']
    #allocation10 [shape = 'u8[1024]{0}', space=vmem, size = 0x400, scoped, tag = 'output window, operand 0']
    %7 = vsyncpa [#allocation6], 0
    %s8 = scalar_lea.sflag [#allocation6], 1
    %9 = vsyncpa %s8, 0
    %10 = vsyncpa [#allocation9], 0
    %s11 = scalar_lea.sflag [#allocation9], 1
    %12 = vsyncpa %s11, 0
    %13 = vsyncpa [#allocation7], 0
    %s14 = scalar_lea.sflag [#allocation7], 1
    %15 = vsyncpa %s14, 0
    loop: start=0, step=1, limit=8
    $region2: #{tpu_custom_call.1} parent=1 // loop_pre_header
      _
    $region3: #{tpu_custom_call.1} parent=1 // loop_header
      %s17 = sphi 0, %s21
      %p18 = scmp.ge.s32.totalorder %s17, 8
      %s24 = sphi 0, %s36
      %s25 = sphi 0, %s32
      %s26 = sphi 0, %s24
      %s27 = sphi 0, %s25
      %s28 = sphi 0, %s26
      %s29 = sphi 0, %s27
      %s39 = sphi 0, %s41
      %s42 = sphi 0, %s39
      %s43 = sphi 0, %s42
      %s59 = sphi 0, %s43
      %s65 = sphi 0, %s67
      %s68 = sphi 0, %s65
      %s69 = sphi 0, %s68
      %s85 = sphi 0, %s69
      %s91 = sphi 0, %s93
      %s94 = sphi 0, %s91
      %s95 = sphi 0, %s94
      %s111 = sphi 0, %s95
    $region4: #{tpu_custom_call.1} parent=1 // loop_header_branch
      %20 = sbr.rel (%p18) target = $region8
    $region5: #{tpu_custom_call.1} parent=1 // loop_body
      %s22 = ssub.s32 %s17, 1
      %s23 = ssub.s32 %s17, 2
      %s30 = sadd.s32 1, %s25
      %p31 = scmp.ge.s32.totalorder %s30, 2
      %s32 = scalar_select %p31, 0, %s30
      %s33 = sadd.s32 1, %s24
      %s34 = scalar_select %p31, %s33, %s24
      %p35 = scmp.ge.s32.totalorder %s34, 3
      %s36 = scalar_select %p35, 0, %s34
      %s37 = ssub.s32 %s25, %s32
      %p38 = scmp.eq.s32.totalorder %s37, 0
      %s40 = sadd.s32 %s39, 1
      %s41 = scalar_select %p38, %s39, %s40
      %p44 = pneg %p38
      %p45 = scmp.eq.s32.totalorder %s17, 5
      %p46 = por %p44, %p45
      %p47 = scmp.ne.s32.totalorder %s39, %s42
      %p48 = scmp.eq.s32.totalorder %s17, 0
      %p49 = por %p47, %p48
      %p50 = scmp.ne.s32.totalorder %s39, %s42
      %p51 = scmp.eq.s32.totalorder %s22, 5
      %p52 = por %p50, %p51
      %p53 = scmp.ne.s32.totalorder %s42, %s43
      %p54 = scmp.eq.s32.totalorder %s22, 0
      %p55 = por %p53, %p54
      %p56 = scmp.ne.s32.totalorder %s42, %s43
      %p57 = scmp.eq.s32.totalorder %s23, 5
      %p58 = por %p56, %p57
      %p60 = scmp.ne.s32.totalorder %s43, %s59
      %p61 = scmp.eq.s32.totalorder %s23, 0
      %p62 = por %p60, %p61
      %s63 = ssub.s32 %s25, %s32
      %p64 = scmp.eq.s32.totalorder %s63, 0
      %s66 = sadd.s32 %s65, 1
      %s67 = scalar_select %p64, %s65, %s66
      %p70 = pneg %p64
      %p71 = scmp.eq.s32.totalorder %s17, 5
      %p72 = por %p70, %p71
      %p73 = scmp.ne.s32.totalorder %s65, %s68
      %p74 = scmp.eq.s32.totalorder %s17, 0
      %p75 = por %p73, %p74
      %p76 = scmp.ne.s32.totalorder %s65, %s68
      %p77 = scmp.eq.s32.totalorder %s22, 5
      %p78 = por %p76, %p77
      %p79 = scmp.ne.s32.totalorder %s68, %s69
      %p80 = scmp.eq.s32.totalorder %s22, 0
      %p81 = por %p79, %p80
      %p82 = scmp.ne.s32.totalorder %s68, %s69
      %p83 = scmp.eq.s32.totalorder %s23, 5
      %p84 = por %p82, %p83
      %p86 = scmp.ne.s32.totalorder %s69, %s85
      %p87 = scmp.eq.s32.totalorder %s23, 0
      %p88 = por %p86, %p87
      %s89 = ssub.s32 %s24, %s36
      %p90 = scmp.eq.s32.totalorder %s89, 0
      %s92 = sadd.s32 %s91, 1
      %s93 = scalar_select %p90, %s91, %s92
      %p96 = pneg %p90
      %p97 = scmp.eq.s32.totalorder %s17, 5
      %p98 = por %p96, %p97
      %p99 = scmp.ne.s32.totalorder %s91, %s94
      %p100 = scmp.eq.s32.totalorder %s17, 0
      %p101 = por %p99, %p100
      %p102 = scmp.ne.s32.totalorder %s91, %s94
      %p103 = scmp.eq.s32.totalorder %s22, 5
      %p104 = por %p102, %p103
      %p105 = scmp.ne.s32.totalorder %s94, %s95
      %p106 = scmp.eq.s32.totalorder %s22, 0
      %p107 = por %p105, %p106
      %p108 = scmp.ne.s32.totalorder %s94, %s95
      %p109 = scmp.eq.s32.totalorder %s23, 5
      %p110 = por %p108, %p109
      %p112 = scmp.ne.s32.totalorder %s95, %s111
      %p113 = scmp.eq.s32.totalorder %s23, 0
      %p114 = por %p112, %p113
      %p115 = scmp.le.s32.totalorder 1, %s17
      %p116 = scmp.lt.s32.totalorder %s17, 7
      %p117 = pnand %p115, %p116
      %p118 = pneg %p117
      // Predicated region
      $region9: #{tpu_custom_call.1} parent=5 // pred_check
        _
      $region10: #{tpu_custom_call.1} parent=5 // pred_check_branch
        %120 = sbr.rel (%p117) target = $region12
      $region11: #{tpu_custom_call.1} parent=5 // pred_region
        %s121 = ssub.s32 %s17, 1
      $region12: #{tpu_custom_call.1} parent=5 // pred_fallthru
        _
      %p122 = scmp.lt.s32.totalorder %s17, 6
      // Predicated region
      $region13: #{tpu_custom_call.1} parent=5 // pred_check
        %p123 = pneg %p122
      $region14: #{tpu_custom_call.1} parent=5 // pred_check_branch
        %125 = sbr.rel (%p123) target = $region16
      $region15: #{tpu_custom_call.1} parent=5 // pred_region
        // Predicated region
        $region17: #{tpu_custom_call.1} parent=15 // pred_check
          %p126 = pneg %p49
        $region18: #{tpu_custom_call.1} parent=15 // pred_check_branch
          %128 = sbr.rel (%p126) target = $region20
        $region19: #{tpu_custom_call.1} parent=15 // pred_region
          %s129 = sand.u32 %s39, 1
          %s130 = scalar_lea.sflag [#allocation6], %s129
          %s131 = sand.u32 %s39, 1
          %s132 = smul.addr %s131, 384
          %s133 = scalar_lea.vmem [#allocation5], %s132
          %s134 = smul.u32 16, %s25
          %s135 = ssub.s32 25, %s134
          %p136 = scmp.lt.s32.totalorder %s135, 16
          %s137 = scalar_select %p136, %s135, 16
          %s138 = smul.u32 128, %s137
          %s139 = smul.u32 %s138, 3
          %s141 = ssub.s32 6144, %s139
          %142 = vsyncadd %s130, %s141
          %p143 = scmp.ne.s32.totalorder 0, %s139
          %s144 = smul.addr %s134, 3
          %s145 = smul.addr %s144, 128
          %s146 = scalar_lea.hbm %s0, %s145
          %s147 = smul.u32 24, %s137
          %s148 = sshll.u32 %s133, 4
          %s149 = int_to_ptr.vmem [resolvable:$true] %s148
          %s150 = sshll.u32 %s147, 4
          %154 = dma.hbm_to_vmem [thread:$0]  (%p143), %s146, %s150, %s149, %s130, 384, 384, 24
        $region20: #{tpu_custom_call.1} parent=15 // pred_fallthru
          _
        // Predicated region
        $region21: #{tpu_custom_call.1} parent=15 // pred_check
          %p155 = pneg %p75
        $region22: #{tpu_custom_call.1} parent=15 // pred_check_branch
          %157 = sbr.rel (%p155) target = $region24
        $region23: #{tpu_custom_call.1} parent=15 // pred_region
          %s158 = sand.u32 %s65, 1
          %s159 = scalar_lea.sflag [#allocation9], %s158
          %s160 = sand.u32 %s65, 1
          %s161 = smul.addr %s160, 384
          %s162 = scalar_lea.vmem [#allocation8], %s161
          %s163 = smul.u32 16, %s25
          %s164 = ssub.s32 25, %s163
          %p165 = scmp.lt.s32.totalorder %s164, 16
          %s166 = scalar_select %p165, %s164, 16
          %s167 = smul.u32 128, %s166
          %s168 = smul.u32 %s167, 3
          %s170 = ssub.s32 6144, %s168
          %171 = vsyncadd %s159, %s170
          %p172 = scmp.ne.s32.totalorder 0, %s168
          %s173 = smul.addr %s163, 3
          %s174 = smul.addr %s173, 128
          %s175 = scalar_lea.hbm %s1, %s174
          %s176 = smul.u32 24, %s166
          %s177 = sshll.u32 %s162, 4
          %s178 = int_to_ptr.vmem [resolvable:$true] %s177
          %s179 = sshll.u32 %s176, 4
          %183 = dma.hbm_to_vmem [thread:$0]  (%p172), %s175, %s179, %s178, %s159, 384, 384, 24
        $region24: #{tpu_custom_call.1} parent=15 // pred_fallthru
          _
      $region16: #{tpu_custom_call.1} parent=5 // pred_fallthru
        _
      %p184 = scmp.le.s32.totalorder 1, %s17
      %p185 = scmp.lt.s32.totalorder %s17, 7
      %p186 = pnand %p184, %p185
      %p187 = pneg %p186
      // Predicated region
      $region25: #{tpu_custom_call.1} parent=5 // pred_check
        _
      $region26: #{tpu_custom_call.1} parent=5 // pred_check_branch
        %189 = sbr.rel (%p186) target = $region28
      $region27: #{tpu_custom_call.1} parent=5 // pred_region
        %s190 = ssub.s32 %s17, 1
        %s191 = sand.u32 %s42, 1
        %s192 = scalar_lea.sflag [#allocation6], %s191
        %s193 = sand.u32 %s42, 1
        %s194 = smul.addr %s193, 384
        %s195 = scalar_lea.vmem [#allocation5], %s194
        // Predicated region
        $region29: #{tpu_custom_call.1} parent=27 // pred_check
          %p196 = pneg %p55
        $region30: #{tpu_custom_call.1} parent=27 // pred_check_branch
          %198 = sbr.rel (%p196) target = $region32
        $region31: #{tpu_custom_call.1} parent=27 // pred_region
          %199 = dma.done %s192, 6144
        $region32: #{tpu_custom_call.1} parent=27 // pred_fallthru
          _
        %s200 = sand.u32 %s68, 1
        %s201 = scalar_lea.sflag [#allocation9], %s200
        %s202 = sand.u32 %s68, 1
        %s203 = smul.addr %s202, 384
        %s204 = scalar_lea.vmem [#allocation8], %s203
        // Predicated region
        $region33: #{tpu_custom_call.1} parent=27 // pred_check
          %p205 = pneg %p81
        $region34: #{tpu_custom_call.1} parent=27 // pred_check_branch
          %207 = sbr.rel (%p205) target = $region36
        $region35: #{tpu_custom_call.1} parent=27 // pred_region
          %208 = dma.done %s201, 6144
        $region36: #{tpu_custom_call.1} parent=27 // pred_fallthru
          _
        %s209 = sand.u32 %s42, 1
        %s210 = scalar_lea.sflag [#allocation6], %s209
        %s211 = sand.u32 %s42, 1
        %s212 = smul.addr %s211, 384
        %s213 = scalar_lea.vmem [#allocation5], %s212
        %p214 = pneg %p55
        %p215 = pneg %p52
        %s216 = sand.u32 %s68, 1
        %s217 = scalar_lea.sflag [#allocation9], %s216
        %s218 = sand.u32 %s68, 1
        %s219 = smul.addr %s218, 384
        %s220 = scalar_lea.vmem [#allocation8], %s219
        %p221 = pneg %p81
        %p222 = pneg %p78
        %p223 = pneg %p107
        %p224 = pneg %p104
        %s225 = sand.u32 %s94, 1
        %s226 = scalar_lea.sflag [#allocation7], %s225
        %s227 = sand.u32 %s94, 1
        %s228 = scalar_lea.vmem [#allocation10], %s227
        %s229 = smul.u32 16, %s27
        %s230 = ssub.s32 25, %s229
        %p231 = scmp.lt.s32.totalorder %s230, 16
        %s232 = scalar_select %p231, %s230, 16
        %s233 = smul.u32 128, %s232
        %s234 = smul.u32 %s233, 3
        %s235 = smul.u32 16, %s27
        %s236 = ssub.s32 25, %s235
        %p237 = scmp.lt.s32.totalorder %s236, 16
        %s238 = scalar_select %p237, %s236, 16
        %s239 = smul.u32 128, %s238
        %s240 = smul.u32 %s239, 3
        %p241 = scmp.eq.s32.totalorder %s27, 0
        // Predicated region
        $region37: #{tpu_custom_call.1} parent=27 // pred_check
          %p242 = pneg %p241
        $region38: #{tpu_custom_call.1} parent=27 // pred_check_branch
          %244 = sbr.rel (%p242) target = $region40
        $region39: #{tpu_custom_call.1} parent=27 // pred_region
          %v245 = vlaneseq
          %vm246 = vcmp.ge.s32.totalorder %v245, 0
          %vm247 = vcmp.lt.s32.totalorder %v245, 384
          %vm248 = vmand %vm246, %vm247
          %249 = vst.msk [vmem:[#allocation2] sm:$0x7] %vm248, 0.0
          %250 = vst.msk [vmem:[#allocation3] sm:$0x7] %vm248, 0.0
          %251 = vst [vmem:[#allocation4] sm:$0xff] 0.0
          %252 = vst [vmem:[#allocation4 + $0x8] sm:$0xff] 0.0
          %253 = vst [vmem:[#allocation4 + $0x10] sm:$0xff] 0.0
          %254 = vst [vmem:[#allocation4 + $0x18] sm:$0xff] 0.0
          %255 = vst [vmem:[#allocation4 + $0x20] sm:$0xff] 0.0
          %256 = vst [vmem:[#allocation4 + $0x28] sm:$0xff] 0.0
          %257 = vst [vmem:[#allocation4 + $0x30] sm:$0xff] 0.0
          %258 = vst [vmem:[#allocation4 + $0x38] sm:$0xff] 0.0
          %259 = vst [vmem:[#allocation4 + $0x40] sm:$0xff] 0.0
          %260 = vst [vmem:[#allocation4 + $0x48] sm:$0xff] 0.0
          %261 = vst [vmem:[#allocation4 + $0x50] sm:$0xff] 0.0
          %262 = vst [vmem:[#allocation4 + $0x58] sm:$0xff] 0.0
          %263 = vst [vmem:[#allocation4 + $0x60] sm:$0xff] 0.0
          %264 = vst [vmem:[#allocation4 + $0x68] sm:$0xff] 0.0
          %265 = vst [vmem:[#allocation4 + $0x70] sm:$0xff] 0.0
          %266 = vst [vmem:[#allocation4 + $0x78] sm:$0xff] 0.0
          %267 = vst [vmem:[#allocation4 + $0x80] sm:$0xff] 0.0
          %268 = vst [vmem:[#allocation4 + $0x88] sm:$0xff] 0.0
          %269 = vst [vmem:[#allocation4 + $0x90] sm:$0xff] 0.0
          %270 = vst [vmem:[#allocation4 + $0x98] sm:$0xff] 0.0
          %271 = vst [vmem:[#allocation4 + $0xa0] sm:$0xff] 0.0
          %272 = vst [vmem:[#allocation4 + $0xa8] sm:$0xff] 0.0
          %273 = vst [vmem:[#allocation4 + $0xb0] sm:$0xff] 0.0
          %274 = vst [vmem:[#allocation4 + $0xb8] sm:$0xff] 0.0
          %275 = vst [vmem:[#allocation4 + $0xc0] sm:$0xff] 0.0
          %276 = vst [vmem:[#allocation4 + $0xc8] sm:$0xff] 0.0
          %277 = vst [vmem:[#allocation4 + $0xd0] sm:$0xff] 0.0
          %278 = vst [vmem:[#allocation4 + $0xd8] sm:$0xff] 0.0
          %279 = vst [vmem:[#allocation4 + $0xe0] sm:$0xff] 0.0
          %280 = vst [vmem:[#allocation4 + $0xe8] sm:$0xff] 0.0
          %281 = vst [vmem:[#allocation4 + $0xf0] sm:$0xff] 0.0
          %282 = vst [vmem:[#allocation4 + $0xf8] sm:$0xff] 0.0
          %283 = vst [vmem:[#allocation4 + $0x100] sm:$0xff] 0.0
          %284 = vst [vmem:[#allocation4 + $0x108] sm:$0xff] 0.0
          %285 = vst [vmem:[#allocation4 + $0x110] sm:$0xff] 0.0
          %286 = vst [vmem:[#allocation4 + $0x118] sm:$0xff] 0.0
          %287 = vst [vmem:[#allocation4 + $0x120] sm:$0xff] 0.0
          %288 = vst [vmem:[#allocation4 + $0x128] sm:$0xff] 0.0
          %289 = vst [vmem:[#allocation4 + $0x130] sm:$0xff] 0.0
          %290 = vst [vmem:[#allocation4 + $0x138] sm:$0xff] 0.0
          %291 = vst [vmem:[#allocation4 + $0x140] sm:$0xff] 0.0
          %292 = vst [vmem:[#allocation4 + $0x148] sm:$0xff] 0.0
          %293 = vst [vmem:[#allocation4 + $0x150] sm:$0xff] 0.0
          %294 = vst [vmem:[#allocation4 + $0x158] sm:$0xff] 0.0
          %295 = vst [vmem:[#allocation4 + $0x160] sm:$0xff] 0.0
          %296 = vst [vmem:[#allocation4 + $0x168] sm:$0xff] 0.0
          %297 = vst [vmem:[#allocation4 + $0x170] sm:$0xff] 0.0
          %298 = vst [vmem:[#allocation4 + $0x178] sm:$0xff] 0.0
        $region40: #{tpu_custom_call.1} parent=27 // pred_fallthru
          _
        %v299 = vld [vmem:[%s195] sm:$0xff]
        %v300 = vld [vmem:[%s195 + $0x8] sm:$0xff]
        %v301 = vld [vmem:[%s195 + $0x10] sm:$0xff]
        %v302 = vld [vmem:[%s195 + $0x18] sm:$0xff]
        %v303 = vld [vmem:[%s195 + $0x20] sm:$0xff]
        %v304 = vld [vmem:[%s195 + $0x28] sm:$0xff]
        %v305 = vld [vmem:[%s195 + $0x30] sm:$0xff]
        %v306 = vld [vmem:[%s195 + $0x38] sm:$0xff]
        %v307 = vld [vmem:[%s195 + $0x40] sm:$0xff]
        %v308 = vld [vmem:[%s195 + $0x48] sm:$0xff]
        %v309 = vld [vmem:[%s195 + $0x50] sm:$0xff]
        %v310 = vld [vmem:[%s195 + $0x58] sm:$0xff]
        %v311 = vld [vmem:[%s195 + $0x60] sm:$0xff]
        %v312 = vld [vmem:[%s195 + $0x68] sm:$0xff]
        %v313 = vld [vmem:[%s195 + $0x70] sm:$0xff]
        %v314 = vld [vmem:[%s195 + $0x78] sm:$0xff]
        %v315 = vld [vmem:[%s195 + $0x80] sm:$0xff]
        %v316 = vld [vmem:[%s195 + $0x88] sm:$0xff]
        %v317 = vld [vmem:[%s195 + $0x90] sm:$0xff]
        %v318 = vld [vmem:[%s195 + $0x98] sm:$0xff]
        %v319 = vld [vmem:[%s195 + $0xa0] sm:$0xff]
        %v320 = vld [vmem:[%s195 + $0xa8] sm:$0xff]
        %v321 = vld [vmem:[%s195 + $0xb0] sm:$0xff]
        %v322 = vld [vmem:[%s195 + $0xb8] sm:$0xff]
        %v323 = vld [vmem:[%s195 + $0xc0] sm:$0xff]
        %v324 = vld [vmem:[%s195 + $0xc8] sm:$0xff]
        %v325 = vld [vmem:[%s195 + $0xd0] sm:$0xff]
        %v326 = vld [vmem:[%s195 + $0xd8] sm:$0xff]
        %v327 = vld [vmem:[%s195 + $0xe0] sm:$0xff]
        %v328 = vld [vmem:[%s195 + $0xe8] sm:$0xff]
        %v329 = vld [vmem:[%s195 + $0xf0] sm:$0xff]
        %v330 = vld [vmem:[%s195 + $0xf8] sm:$0xff]
        %v331 = vld [vmem:[%s195 + $0x100] sm:$0xff]
        %v332 = vld [vmem:[%s195 + $0x108] sm:$0xff]
        %v333 = vld [vmem:[%s195 + $0x110] sm:$0xff]
        %v334 = vld [vmem:[%s195 + $0x118] sm:$0xff]
        %v335 = vld [vmem:[%s195 + $0x120] sm:$0xff]
        %v336 = vld [vmem:[%s195 + $0x128] sm:$0xff]
        %v337 = vld [vmem:[%s195 + $0x130] sm:$0xff]
        %v338 = vld [vmem:[%s195 + $0x138] sm:$0xff]
        %v339 = vld [vmem:[%s195 + $0x140] sm:$0xff]
        %v340 = vld [vmem:[%s195 + $0x148] sm:$0xff]
        %v341 = vld [vmem:[%s195 + $0x150] sm:$0xff]
        %v342 = vld [vmem:[%s195 + $0x158] sm:$0xff]
        %v343 = vld [vmem:[%s195 + $0x160] sm:$0xff]
        %v344 = vld [vmem:[%s195 + $0x168] sm:$0xff]
        %v345 = vld [vmem:[%s195 + $0x170] sm:$0xff]
        %v346 = vld [vmem:[%s195 + $0x178] sm:$0xff]
        %v347 = vld [vmem:[%s204] sm:$0xff]
        %v348 = vld [vmem:[%s204 + $0x8] sm:$0xff]
        %v349 = vld [vmem:[%s204 + $0x10] sm:$0xff]
        %v350 = vld [vmem:[%s204 + $0x18] sm:$0xff]
        %v351 = vld [vmem:[%s204 + $0x20] sm:$0xff]
        %v352 = vld [vmem:[%s204 + $0x28] sm:$0xff]
        %v353 = vld [vmem:[%s204 + $0x30] sm:$0xff]
        %v354 = vld [vmem:[%s204 + $0x38] sm:$0xff]
        %v355 = vld [vmem:[%s204 + $0x40] sm:$0xff]
        %v356 = vld [vmem:[%s204 + $0x48] sm:$0xff]
        %v357 = vld [vmem:[%s204 + $0x50] sm:$0xff]
        %v358 = vld [vmem:[%s204 + $0x58] sm:$0xff]
        %v359 = vld [vmem:[%s204 + $0x60] sm:$0xff]
        %v360 = vld [vmem:[%s204 + $0x68] sm:$0xff]
        %v361 = vld [vmem:[%s204 + $0x70] sm:$0xff]
        %v362 = vld [vmem:[%s204 + $0x78] sm:$0xff]
        %v363 = vld [vmem:[%s204 + $0x80] sm:$0xff]
        %v364 = vld [vmem:[%s204 + $0x88] sm:$0xff]
        %v365 = vld [vmem:[%s204 + $0x90] sm:$0xff]
        %v366 = vld [vmem:[%s204 + $0x98] sm:$0xff]
        %v367 = vld [vmem:[%s204 + $0xa0] sm:$0xff]
        %v368 = vld [vmem:[%s204 + $0xa8] sm:$0xff]
        %v369 = vld [vmem:[%s204 + $0xb0] sm:$0xff]
        %v370 = vld [vmem:[%s204 + $0xb8] sm:$0xff]
        %v371 = vld [vmem:[%s204 + $0xc0] sm:$0xff]
        %v372 = vld [vmem:[%s204 + $0xc8] sm:$0xff]
        %v373 = vld [vmem:[%s204 + $0xd0] sm:$0xff]
        %v374 = vld [vmem:[%s204 + $0xd8] sm:$0xff]
        %v375 = vld [vmem:[%s204 + $0xe0] sm:$0xff]
        %v376 = vld [vmem:[%s204 + $0xe8] sm:$0xff]
        %v377 = vld [vmem:[%s204 + $0xf0] sm:$0xff]
        %v378 = vld [vmem:[%s204 + $0xf8] sm:$0xff]
        %v379 = vld [vmem:[%s204 + $0x100] sm:$0xff]
        %v380 = vld [vmem:[%s204 + $0x108] sm:$0xff]
        %v381 = vld [vmem:[%s204 + $0x110] sm:$0xff]
        %v382 = vld [vmem:[%s204 + $0x118] sm:$0xff]
        %v383 = vld [vmem:[%s204 + $0x120] sm:$0xff]
        %v384 = vld [vmem:[%s204 + $0x128] sm:$0xff]
        %v385 = vld [vmem:[%s204 + $0x130] sm:$0xff]
        %v386 = vld [vmem:[%s204 + $0x138] sm:$0xff]
        %v387 = vld [vmem:[%s204 + $0x140] sm:$0xff]
        %v388 = vld [vmem:[%s204 + $0x148] sm:$0xff]
        %v389 = vld [vmem:[%s204 + $0x150] sm:$0xff]
        %v390 = vld [vmem:[%s204 + $0x158] sm:$0xff]
        %v391 = vld [vmem:[%s204 + $0x160] sm:$0xff]
        %v392 = vld [vmem:[%s204 + $0x168] sm:$0xff]
        %v393 = vld [vmem:[%s204 + $0x170] sm:$0xff]
        %v394 = vld [vmem:[%s204 + $0x178] sm:$0xff]
        %s395 = smul.u32 %s27, 128
        %s396 = ssub.s32 200, %s395
        %v397 = vlaneseq
        %v398 = vshrl.u32 %v397, 7
        %v399 = vadd.s32 %v398, 8
        %v400 = vadd.s32 %v398, 16
        %v401 = vadd.s32 %v398, 24
        %v402 = vadd.s32 %v398, 32
        %v403 = vadd.s32 %v398, 40
        %v404 = vadd.s32 %v398, 48
        %v405 = vadd.s32 %v398, 56
        %v406 = vadd.s32 %v398, 64
        %v407 = vadd.s32 %v398, 72
        %v408 = vadd.s32 %v398, 80
        %v409 = vadd.s32 %v398, 88
        %v410 = vadd.s32 %v398, 96
        %v411 = vadd.s32 %v398, 104
        %v412 = vadd.s32 %v398, 112
        %v413 = vadd.s32 %v398, 120
        %v414 = vstv %s396
        %vm415 = vcmp.lt.s32.totalorder %v398, %v414
        %vm416 = vcmp.lt.s32.totalorder %v399, %v414
        %vm417 = vcmp.lt.s32.totalorder %v400, %v414
        %vm418 = vcmp.lt.s32.totalorder %v401, %v414
        %vm419 = vcmp.lt.s32.totalorder %v402, %v414
        %vm420 = vcmp.lt.s32.totalorder %v403, %v414
        %vm421 = vcmp.lt.s32.totalorder %v404, %v414
        %vm422 = vcmp.lt.s32.totalorder %v405, %v414
        %vm423 = vcmp.lt.s32.totalorder %v406, %v414
        %vm424 = vcmp.lt.s32.totalorder %v407, %v414
        %vm425 = vcmp.lt.s32.totalorder %v408, %v414
        %vm426 = vcmp.lt.s32.totalorder %v409, %v414
        %vm427 = vcmp.lt.s32.totalorder %v410, %v414
        %vm428 = vcmp.lt.s32.totalorder %v411, %v414
        %vm429 = vcmp.lt.s32.totalorder %v412, %v414
        %vm430 = vcmp.lt.s32.totalorder %v413, %v414
        %v431 = vsel %vm415, 1, 0
        %v432 = vsel %vm416, 1, 0
        %v433 = vsel %vm417, 1, 0
        %v434 = vsel %vm418, 1, 0
        %v435 = vsel %vm419, 1, 0
        %v436 = vsel %vm420, 1, 0
        %v437 = vsel %vm421, 1, 0
        %v438 = vsel %vm422, 1, 0
        %v439 = vsel %vm423, 1, 0
        %v440 = vsel %vm424, 1, 0
        %v441 = vsel %vm425, 1, 0
        %v442 = vsel %vm426, 1, 0
        %v443 = vsel %vm427, 1, 0
        %v444 = vsel %vm428, 1, 0
        %v445 = vsel %vm429, 1, 0
        %v446 = vsel %vm430, 1, 0
        %vm447 = vcmp.eq.s32.totalorder %v431, 1
        %vm448 = vcmp.eq.s32.totalorder %v432, 1
        %vm449 = vcmp.eq.s32.totalorder %v433, 1
        %vm450 = vcmp.eq.s32.totalorder %v434, 1
        %vm451 = vcmp.eq.s32.totalorder %v435, 1
        %vm452 = vcmp.eq.s32.totalorder %v436, 1
        %vm453 = vcmp.eq.s32.totalorder %v437, 1
        %vm454 = vcmp.eq.s32.totalorder %v438, 1
        %vm455 = vcmp.eq.s32.totalorder %v439, 1
        %vm456 = vcmp.eq.s32.totalorder %v440, 1
        %vm457 = vcmp.eq.s32.totalorder %v441, 1
        %vm458 = vcmp.eq.s32.totalorder %v442, 1
        %vm459 = vcmp.eq.s32.totalorder %v443, 1
        %vm460 = vcmp.eq.s32.totalorder %v444, 1
        %vm461 = vcmp.eq.s32.totalorder %v445, 1
        %vm462 = vcmp.eq.s32.totalorder %v446, 1
        %v463 = vsel %vm447, %v299, 0.0
        %v464 = vsel %vm447, %v300, 0.0
        %v465 = vsel %vm447, %v301, 0.0
        %v466 = vsel %vm448, %v302, 0.0
        %v467 = vsel %vm448, %v303, 0.0
        %v468 = vsel %vm448, %v304, 0.0
        %v469 = vsel %vm449, %v305, 0.0
        %v470 = vsel %vm449, %v306, 0.0
        %v471 = vsel %vm449, %v307, 0.0
        %v472 = vsel %vm450, %v308, 0.0
        %v473 = vsel %vm450, %v309, 0.0
        %v474 = vsel %vm450, %v310, 0.0
        %v475 = vsel %vm451, %v311, 0.0
        %v476 = vsel %vm451, %v312, 0.0
        %v477 = vsel %vm451, %v313, 0.0
        %v478 = vsel %vm452, %v314, 0.0
        %v479 = vsel %vm452, %v315, 0.0
        %v480 = vsel %vm452, %v316, 0.0
        %v481 = vsel %vm453, %v317, 0.0
        %v482 = vsel %vm453, %v318, 0.0
        %v483 = vsel %vm453, %v319, 0.0
        %v484 = vsel %vm454, %v320, 0.0
        %v485 = vsel %vm454, %v321, 0.0
        %v486 = vsel %vm454, %v322, 0.0
        %v487 = vsel %vm455, %v323, 0.0
        %v488 = vsel %vm455, %v324, 0.0
        %v489 = vsel %vm455, %v325, 0.0
        %v490 = vsel %vm456, %v326, 0.0
        %v491 = vsel %vm456, %v327, 0.0
        %v492 = vsel %vm456, %v328, 0.0
        %v493 = vsel %vm457, %v329, 0.0
        %v494 = vsel %vm457, %v330, 0.0
        %v495 = vsel %vm457, %v331, 0.0
        %v496 = vsel %vm458, %v332, 0.0
        %v497 = vsel %vm458, %v333, 0.0
        %v498 = vsel %vm458, %v334, 0.0
        %v499 = vsel %vm459, %v335, 0.0
        %v500 = vsel %vm459, %v336, 0.0
        %v501 = vsel %vm459, %v337, 0.0
        %v502 = vsel %vm460, %v338, 0.0
        %v503 = vsel %vm460, %v339, 0.0
        %v504 = vsel %vm460, %v340, 0.0
        %v505 = vsel %vm461, %v341, 0.0
        %v506 = vsel %vm461, %v342, 0.0
        %v507 = vsel %vm461, %v343, 0.0
        %v508 = vsel %vm462, %v344, 0.0
        %v509 = vsel %vm462, %v345, 0.0
        %v510 = vsel %vm462, %v346, 0.0
        %v511 = vsel %vm447, %v347, 0.0
        %v512 = vsel %vm447, %v348, 0.0
        %v513 = vsel %vm447, %v349, 0.0
        %v514 = vsel %vm448, %v350, 0.0
        %v515 = vsel %vm448, %v351, 0.0
        %v516 = vsel %vm448, %v352, 0.0
        %v517 = vsel %vm449, %v353, 0.0
        %v518 = vsel %vm449, %v354, 0.0
        %v519 = vsel %vm449, %v355, 0.0
        %v520 = vsel %vm450, %v356, 0.0
        %v521 = vsel %vm450, %v357, 0.0
        %v522 = vsel %vm450, %v358, 0.0
        %v523 = vsel %vm451, %v359, 0.0
        %v524 = vsel %vm451, %v360, 0.0
        %v525 = vsel %vm451, %v361, 0.0
        %v526 = vsel %vm452, %v362, 0.0
        %v527 = vsel %vm452, %v363, 0.0
        %v528 = vsel %vm452, %v364, 0.0
        %v529 = vsel %vm453, %v365, 0.0
        %v530 = vsel %vm453, %v366, 0.0
        %v531 = vsel %vm453, %v367, 0.0
        %v532 = vsel %vm454, %v368, 0.0
        %v533 = vsel %vm454, %v369, 0.0
        %v534 = vsel %vm454, %v370, 0.0
        %v535 = vsel %vm455, %v371, 0.0
        %v536 = vsel %vm455, %v372, 0.0
        %v537 = vsel %vm455, %v373, 0.0
        %v538 = vsel %vm456, %v374, 0.0
        %v539 = vsel %vm456, %v375, 0.0
        %v540 = vsel %vm456, %v376, 0.0
        %v541 = vsel %vm457, %v377, 0.0
        %v542 = vsel %vm457, %v378, 0.0
        %v543 = vsel %vm457, %v379, 0.0
        %v544 = vsel %vm458, %v380, 0.0
        %v545 = vsel %vm458, %v381, 0.0
        %v546 = vsel %vm458, %v382, 0.0
        %v547 = vsel %vm459, %v383, 0.0
        %v548 = vsel %vm459, %v384, 0.0
        %v549 = vsel %vm459, %v385, 0.0
        %v550 = vsel %vm460, %v386, 0.0
        %v551 = vsel %vm460, %v387, 0.0
        %v552 = vsel %vm460, %v388, 0.0
        %v553 = vsel %vm461, %v389, 0.0
        %v554 = vsel %vm461, %v390, 0.0
        %v555 = vsel %vm461, %v391, 0.0
        %v556 = vsel %vm462, %v392, 0.0
        %v557 = vsel %vm462, %v393, 0.0
        %v558 = vsel %vm462, %v394, 0.0
        %v559 = vld [vmem:[#allocation2] sm:$0x7]
        %v560 = vadd.f32 %v463, %v466
        %v561 = vadd.f32 %v560, %v469
        %v562 = vadd.f32 %v561, %v472
        %v563 = vadd.f32 %v562, %v475
        %v564 = vadd.f32 %v563, %v478
        %v565 = vadd.f32 %v564, %v481
        %v566 = vadd.f32 %v565, %v484
        %v567 = vadd.f32 %v566, %v487
        %v568 = vadd.f32 %v567, %v490
        %v569 = vadd.f32 %v568, %v493
        %v570 = vadd.f32 %v569, %v496
        %v571 = vadd.f32 %v570, %v499
        %v572 = vadd.f32 %v571, %v502
        %v573 = vadd.f32 %v572, %v505
        %v574 = vadd.f32 %v573, %v508
        %v575 = vrot.slane %v574, 4
        %v576 = vadd.f32 %v574, %v575
        %v577 = vrot.slane %v576, 2
        %v578 = vadd.f32 %v576, %v577
        %v579 = vrot.slane %v578, 1
        %v580 = vadd.f32 %v578, %v579
        %v581 = vadd.f32 %v464, %v467
        %v582 = vadd.f32 %v581, %v470
        %v583 = vadd.f32 %v582, %v473
        %v584 = vadd.f32 %v583, %v476
        %v585 = vadd.f32 %v584, %v479
        %v586 = vadd.f32 %v585, %v482
        %v587 = vadd.f32 %v586, %v485
        %v588 = vadd.f32 %v587, %v488
        %v589 = vadd.f32 %v588, %v491
        %v590 = vadd.f32 %v589, %v494
        %v591 = vadd.f32 %v590, %v497
        %v592 = vadd.f32 %v591, %v500
        %v593 = vadd.f32 %v592, %v503
        %v594 = vadd.f32 %v593, %v506
        %v595 = vadd.f32 %v594, %v509
        %v596 = vrot.slane %v595, 4
        %v597 = vadd.f32 %v595, %v596
        %v598 = vrot.slane %v597, 2
        %v599 = vadd.f32 %v597, %v598
        %v600 = vrot.slane %v599, 1
        %v601 = vadd.f32 %v599, %v600
        %v602 = vadd.f32 %v465, %v468
        %v603 = vadd.f32 %v602, %v471
        %v604 = vadd.f32 %v603, %v474
        %v605 = vadd.f32 %v604, %v477
        %v606 = vadd.f32 %v605, %v480
        %v607 = vadd.f32 %v606, %v483
        %v608 = vadd.f32 %v607, %v486
        %v609 = vadd.f32 %v608, %v489
        %v610 = vadd.f32 %v609, %v492
        %v611 = vadd.f32 %v610, %v495
        %v612 = vadd.f32 %v611, %v498
        %v613 = vadd.f32 %v612, %v501
        %v614 = vadd.f32 %v613, %v504
        %v615 = vadd.f32 %v614, %v507
        %v616 = vadd.f32 %v615, %v510
        %v617 = vrot.slane %v616, 4
        %v618 = vadd.f32 %v616, %v617
        %v619 = vrot.slane %v618, 2
        %v620 = vadd.f32 %v618, %v619
        %v621 = vrot.slane %v620, 1
        %v622 = vadd.f32 %v620, %v621
        %v626 = vcombine.low %v580, %v601
        %v628 = vunpack.c.l.s4 1966171168
        %v629 = vunpack.c.0.s8 %v628
        %v630 = vlaneseq
        %v631 = vshrl.u32 %v630, 7
        %v632 = vsub.s32 %v629, %v631
        %v633 = vrot.slane %v626, %v632
        %v635 = vunpack.c.l.s4 1966171168
        %v636 = vunpack.c.0.s8 %v635
        %v637 = vlaneseq
        %v638 = vshrl.u32 %v637, 7
        %v639 = vsub.s32 %v636, %v638
        %v640 = vrot.slane %v622, %v639
        %v641 = vcombine.low %v633, %v640
        %v643 = vunpack.c.l.s4 1966171168
        %v644 = vunpack.c.0.s8 %v643
        %v645 = vlaneseq
        %v646 = vshrl.u32 %v645, 7
        %v647 = vsub.s32 %v644, %v646
        %v648 = vrot.slane %v641, %v647
        %v650 = vadd.f32 %v559, %v648
        %v651 = vlaneseq
        %vm652 = vcmp.ge.s32.totalorder %v651, 0
        %vm653 = vcmp.lt.s32.totalorder %v651, 384
        %vm654 = vmand %vm652, %vm653
        %655 = vst.msk [vmem:[#allocation2] sm:$0x7] %vm654, %v650
        %v656 = vld [vmem:[#allocation3] sm:$0x7]
        %v657 = vadd.f32 %v511, %v514
        %v658 = vadd.f32 %v657, %v517
        %v659 = vadd.f32 %v658, %v520
        %v660 = vadd.f32 %v659, %v523
        %v661 = vadd.f32 %v660, %v526
        %v662 = vadd.f32 %v661, %v529
        %v663 = vadd.f32 %v662, %v532
        %v664 = vadd.f32 %v663, %v535
        %v665 = vadd.f32 %v664, %v538
        %v666 = vadd.f32 %v665, %v541
        %v667 = vadd.f32 %v666, %v544
        %v668 = vadd.f32 %v667, %v547
        %v669 = vadd.f32 %v668, %v550
        %v670 = vadd.f32 %v669, %v553
        %v671 = vadd.f32 %v670, %v556
        %v672 = vrot.slane %v671, 4
        %v673 = vadd.f32 %v671, %v672
        %v674 = vrot.slane %v673, 2
        %v675 = vadd.f32 %v673, %v674
        %v676 = vrot.slane %v675, 1
        %v677 = vadd.f32 %v675, %v676
        %v678 = vadd.f32 %v512, %v515
        %v679 = vadd.f32 %v678, %v518
        %v680 = vadd.f32 %v679, %v521
        %v681 = vadd.f32 %v680, %v524
        %v682 = vadd.f32 %v681, %v527
        %v683 = vadd.f32 %v682, %v530
        %v684 = vadd.f32 %v683, %v533
        %v685 = vadd.f32 %v684, %v536
        %v686 = vadd.f32 %v685, %v539
        %v687 = vadd.f32 %v686, %v542
        %v688 = vadd.f32 %v687, %v545
        %v689 = vadd.f32 %v688, %v548
        %v690 = vadd.f32 %v689, %v551
        %v691 = vadd.f32 %v690, %v554
        %v692 = vadd.f32 %v691, %v557
        %v693 = vrot.slane %v692, 4
        %v694 = vadd.f32 %v692, %v693
        %v695 = vrot.slane %v694, 2
        %v696 = vadd.f32 %v694, %v695
        %v697 = vrot.slane %v696, 1
        %v698 = vadd.f32 %v696, %v697
        %v699 = vadd.f32 %v513, %v516
        %v700 = vadd.f32 %v699, %v519
        %v701 = vadd.f32 %v700, %v522
        %v702 = vadd.f32 %v701, %v525
        %v703 = vadd.f32 %v702, %v528
        %v704 = vadd.f32 %v703, %v531
        %v705 = vadd.f32 %v704, %v534
        %v706 = vadd.f32 %v705, %v537
        %v707 = vadd.f32 %v706, %v540
        %v708 = vadd.f32 %v707, %v543
        %v709 = vadd.f32 %v708, %v546
        %v710 = vadd.f32 %v709, %v549
        %v711 = vadd.f32 %v710, %v552
        %v712 = vadd.f32 %v711, %v555
        %v713 = vadd.f32 %v712, %v558
        %v714 = vrot.slane %v713, 4
        %v715 = vadd.f32 %v713, %v714
        %v716 = vrot.slane %v715, 2
        %v717 = vadd.f32 %v715, %v716
        %v718 = vrot.slane %v717, 1
        %v719 = vadd.f32 %v717, %v718
        %v723 = vcombine.low %v677, %v698
        %v725 = vunpack.c.l.s4 1966171168
        %v726 = vunpack.c.0.s8 %v725
        %v727 = vlaneseq
        %v728 = vshrl.u32 %v727, 7
        %v729 = vsub.s32 %v726, %v728
        %v730 = vrot.slane %v723, %v729
        %v732 = vunpack.c.l.s4 1966171168
        %v733 = vunpack.c.0.s8 %v732
        %v734 = vlaneseq
        %v735 = vshrl.u32 %v734, 7
        %v736 = vsub.s32 %v733, %v735
        %v737 = vrot.slane %v719, %v736
        %v738 = vcombine.low %v730, %v737
        %v740 = vunpack.c.l.s4 1966171168
        %v741 = vunpack.c.0.s8 %v740
        %v742 = vlaneseq
        %v743 = vshrl.u32 %v742, 7
        %v744 = vsub.s32 %v741, %v743
        %v745 = vrot.slane %v738, %v744
        %v747 = vadd.f32 %v656, %v745
        %748 = vst.msk [vmem:[#allocation3] sm:$0x7] %vm654, %v747
        %s749 = smul.u32 %s26, 128
        %s750 = sshra.s32 %s749, 7
        %s751 = sand.u32 %s749, 127
        %s752 = smul.addr %s750, 8
        %s753 = scalar_lea.vmem %s195, %s752 [#allocation5]
        %v754 = vld [vmem:[%s753] sm:$0xff]
        %v755 = vld [vmem:[%s753 + $0x18] sm:$0xff]
        %v756 = vld [vmem:[%s753 + $0x30] sm:$0xff]
        %v757 = vld [vmem:[%s753 + $0x48] sm:$0xff]
        %v758 = vld [vmem:[%s753 + $0x60] sm:$0xff]
        %v759 = vld [vmem:[%s753 + $0x78] sm:$0xff]
        %v760 = vld [vmem:[%s753 + $0x90] sm:$0xff]
        %v761 = vld [vmem:[%s753 + $0xa8] sm:$0xff]
        %v762 = vld [vmem:[%s753 + $0xc0] sm:$0xff]
        %v763 = vld [vmem:[%s753 + $0xd8] sm:$0xff]
        %v764 = vld [vmem:[%s753 + $0xf0] sm:$0xff]
        %v765 = vld [vmem:[%s753 + $0x108] sm:$0xff]
        %v766 = vld [vmem:[%s753 + $0x120] sm:$0xff]
        %v767 = vld [vmem:[%s753 + $0x138] sm:$0xff]
        %v768 = vld [vmem:[%s753 + $0x150] sm:$0xff]
        %v769 = vld [vmem:[%s753 + $0x168] sm:$0xff]
        %s770 = smul.addr %s750, 8
        %s771 = scalar_lea.vmem %s204, %s770 [#allocation8]
        %v772 = vld [vmem:[%s771] sm:$0xff]
        %v773 = vld [vmem:[%s771 + $0x18] sm:$0xff]
        %v774 = vld [vmem:[%s771 + $0x30] sm:$0xff]
        %v775 = vld [vmem:[%s771 + $0x48] sm:$0xff]
        %v776 = vld [vmem:[%s771 + $0x60] sm:$0xff]
        %v777 = vld [vmem:[%s771 + $0x78] sm:$0xff]
        %v778 = vld [vmem:[%s771 + $0x90] sm:$0xff]
        %v779 = vld [vmem:[%s771 + $0xa8] sm:$0xff]
        %v780 = vld [vmem:[%s771 + $0xc0] sm:$0xff]
        %v781 = vld [vmem:[%s771 + $0xd8] sm:$0xff]
        %v782 = vld [vmem:[%s771 + $0xf0] sm:$0xff]
        %v783 = vld [vmem:[%s771 + $0x108] sm:$0xff]
        %v784 = vld [vmem:[%s771 + $0x120] sm:$0xff]
        %v785 = vld [vmem:[%s771 + $0x138] sm:$0xff]
        %v786 = vld [vmem:[%s771 + $0x150] sm:$0xff]
        %v787 = vld [vmem:[%s771 + $0x168] sm:$0xff]
        %v788 = vsel %vm447, %v754, 0.0
        %v789 = vsel %vm448, %v755, 0.0
        %v790 = vsel %vm449, %v756, 0.0
        %v791 = vsel %vm450, %v757, 0.0
        %v792 = vsel %vm451, %v758, 0.0
        %v793 = vsel %vm452, %v759, 0.0
        %v794 = vsel %vm453, %v760, 0.0
        %v795 = vsel %vm454, %v761, 0.0
        %v796 = vsel %vm455, %v762, 0.0
        %v797 = vsel %vm456, %v763, 0.0
        %v798 = vsel %vm457, %v764, 0.0
        %v799 = vsel %vm458, %v765, 0.0
        %v800 = vsel %vm459, %v766, 0.0
        %v801 = vsel %vm460, %v767, 0.0
        %v802 = vsel %vm461, %v768, 0.0
        %v803 = vsel %vm462, %v769, 0.0
        %v804 = vsel %vm447, %v772, 0.0
        %v805 = vsel %vm448, %v773, 0.0
        %v806 = vsel %vm449, %v774, 0.0
        %v807 = vsel %vm450, %v775, 0.0
        %v808 = vsel %vm451, %v776, 0.0
        %v809 = vsel %vm452, %v777, 0.0
        %v810 = vsel %vm453, %v778, 0.0
        %v811 = vsel %vm454, %v779, 0.0
        %v812 = vsel %vm455, %v780, 0.0
        %v813 = vsel %vm456, %v781, 0.0
        %v814 = vsel %vm457, %v782, 0.0
        %v815 = vsel %vm458, %v783, 0.0
        %v816 = vsel %vm459, %v784, 0.0
        %v817 = vsel %vm460, %v785, 0.0
        %v818 = vsel %vm461, %v786, 0.0
        %v819 = vsel %vm462, %v787, 0.0
        %v820 = vsub.f32 0.0, %v804
        %v821 = vsub.f32 0.0, %v805
        %v822 = vsub.f32 0.0, %v806
        %v823 = vsub.f32 0.0, %v807
        %v824 = vsub.f32 0.0, %v808
        %v825 = vsub.f32 0.0, %v809
        %v826 = vsub.f32 0.0, %v810
        %v827 = vsub.f32 0.0, %v811
        %v828 = vsub.f32 0.0, %v812
        %v829 = vsub.f32 0.0, %v813
        %v830 = vsub.f32 0.0, %v814
        %v831 = vsub.f32 0.0, %v815
        %v832 = vsub.f32 0.0, %v816
        %v833 = vsub.f32 0.0, %v817
        %v834 = vsub.f32 0.0, %v818
        %v835 = vsub.f32 0.0, %v819
        %v836 = vld [vmem:[#allocation4] sm:$0xff]
        %v837 = vld [vmem:[#allocation4 + $0x8] sm:$0xff]
        %v838 = vld [vmem:[#allocation4 + $0x10] sm:$0xff]
        %v839 = vld [vmem:[#allocation4 + $0x18] sm:$0xff]
        %v840 = vld [vmem:[#allocation4 + $0x20] sm:$0xff]
        %v841 = vld [vmem:[#allocation4 + $0x28] sm:$0xff]
        %v842 = vld [vmem:[#allocation4 + $0x30] sm:$0xff]
        %v843 = vld [vmem:[#allocation4 + $0x38] sm:$0xff]
        %v844 = vld [vmem:[#allocation4 + $0x40] sm:$0xff]
        %v845 = vld [vmem:[#allocation4 + $0x48] sm:$0xff]
        %v846 = vld [vmem:[#allocation4 + $0x50] sm:$0xff]
        %v847 = vld [vmem:[#allocation4 + $0x58] sm:$0xff]
        %v848 = vld [vmem:[#allocation4 + $0x60] sm:$0xff]
        %v849 = vld [vmem:[#allocation4 + $0x68] sm:$0xff]
        %v850 = vld [vmem:[#allocation4 + $0x70] sm:$0xff]
        %v851 = vld [vmem:[#allocation4 + $0x78] sm:$0xff]
        %v852 = vld [vmem:[#allocation4 + $0x80] sm:$0xff]
        %v853 = vld [vmem:[#allocation4 + $0x88] sm:$0xff]
        %v854 = vld [vmem:[#allocation4 + $0x90] sm:$0xff]
        %v855 = vld [vmem:[#allocation4 + $0x98] sm:$0xff]
        %v856 = vld [vmem:[#allocation4 + $0xa0] sm:$0xff]
        %v857 = vld [vmem:[#allocation4 + $0xa8] sm:$0xff]
        %v858 = vld [vmem:[#allocation4 + $0xb0] sm:$0xff]
        %v859 = vld [vmem:[#allocation4 + $0xb8] sm:$0xff]
        %v860 = vld [vmem:[#allocation4 + $0xc0] sm:$0xff]
        %v861 = vld [vmem:[#allocation4 + $0xc8] sm:$0xff]
        %v862 = vld [vmem:[#allocation4 + $0xd0] sm:$0xff]
        %v863 = vld [vmem:[#allocation4 + $0xd8] sm:$0xff]
        %v864 = vld [vmem:[#allocation4 + $0xe0] sm:$0xff]
        %v865 = vld [vmem:[#allocation4 + $0xe8] sm:$0xff]
        %v866 = vld [vmem:[#allocation4 + $0xf0] sm:$0xff]
        %v867 = vld [vmem:[#allocation4 + $0xf8] sm:$0xff]
        %v868 = vld [vmem:[#allocation4 + $0x100] sm:$0xff]
        %v869 = vld [vmem:[#allocation4 + $0x108] sm:$0xff]
        %v870 = vld [vmem:[#allocation4 + $0x110] sm:$0xff]
        %v871 = vld [vmem:[#allocation4 + $0x118] sm:$0xff]
        %v872 = vld [vmem:[#allocation4 + $0x120] sm:$0xff]
        %v873 = vld [vmem:[#allocation4 + $0x128] sm:$0xff]
        %v874 = vld [vmem:[#allocation4 + $0x130] sm:$0xff]
        %v875 = vld [vmem:[#allocation4 + $0x138] sm:$0xff]
        %v876 = vld [vmem:[#allocation4 + $0x140] sm:$0xff]
        %v877 = vld [vmem:[#allocation4 + $0x148] sm:$0xff]
        %v878 = vld [vmem:[#allocation4 + $0x150] sm:$0xff]
        %v879 = vld [vmem:[#allocation4 + $0x158] sm:$0xff]
        %v880 = vld [vmem:[#allocation4 + $0x160] sm:$0xff]
        %v881 = vld [vmem:[#allocation4 + $0x168] sm:$0xff]
        %v882 = vld [vmem:[#allocation4 + $0x170] sm:$0xff]
        %v883 = vld [vmem:[#allocation4 + $0x178] sm:$0xff]
        %884 = vxpose.xlu0.b32.start [1/16] %v463, 128
        %885 = vxpose.xlu0.b32.cont [2/16] %v466, 128
        %886 = vxpose.xlu0.b32.cont [3/16] %v469, 128
        %887 = vxpose.xlu0.b32.cont [4/16] %v472, 128
        %888 = vxpose.xlu0.b32.cont [5/16] %v475, 128
        %889 = vxpose.xlu0.b32.cont [6/16] %v478, 128
        %890 = vxpose.xlu0.b32.cont [7/16] %v481, 128
        %891 = vxpose.xlu0.b32.cont [8/16] %v484, 128
        %892 = vxpose.xlu0.b32.cont [9/16] %v487, 128
        %893 = vxpose.xlu0.b32.cont [10/16] %v490, 128
        %894 = vxpose.xlu0.b32.cont [11/16] %v493, 128
        %895 = vxpose.xlu0.b32.cont [12/16] %v496, 128
        %896 = vxpose.xlu0.b32.cont [13/16] %v499, 128
        %897 = vxpose.xlu0.b32.cont [14/16] %v502, 128
        %898 = vxpose.xlu0.b32.cont [15/16] %v505, 128
        %899 = vxpose.xlu0.b32.end [16/16] %v508, 128
        %v900 = vpop.trf.xlu0
        %v901 = vpop.trf.xlu0
        %v902 = vpop.trf.xlu0
        %v903 = vpop.trf.xlu0
        %v904 = vpop.trf.xlu0
        %v905 = vpop.trf.xlu0
        %v906 = vpop.trf.xlu0
        %v907 = vpop.trf.xlu0
        %v908 = vpop.trf.xlu0
        %v909 = vpop.trf.xlu0
        %v910 = vpop.trf.xlu0
        %v911 = vpop.trf.xlu0
        %v912 = vpop.trf.xlu0
        %v913 = vpop.trf.xlu0
        %v914 = vpop.trf.xlu0
        %v915 = vpop.trf.xlu0
        %916 = vxpose.xlu0.b32.start [1/16] %v464, 128
        %917 = vxpose.xlu0.b32.cont [2/16] %v467, 128
        %918 = vxpose.xlu0.b32.cont [3/16] %v470, 128
        %919 = vxpose.xlu0.b32.cont [4/16] %v473, 128
        %920 = vxpose.xlu0.b32.cont [5/16] %v476, 128
        %921 = vxpose.xlu0.b32.cont [6/16] %v479, 128
        %922 = vxpose.xlu0.b32.cont [7/16] %v482, 128
        %923 = vxpose.xlu0.b32.cont [8/16] %v485, 128
        %924 = vxpose.xlu0.b32.cont [9/16] %v488, 128
        %925 = vxpose.xlu0.b32.cont [10/16] %v491, 128
        %926 = vxpose.xlu0.b32.cont [11/16] %v494, 128
        %927 = vxpose.xlu0.b32.cont [12/16] %v497, 128
        %928 = vxpose.xlu0.b32.cont [13/16] %v500, 128
        %929 = vxpose.xlu0.b32.cont [14/16] %v503, 128
        %930 = vxpose.xlu0.b32.cont [15/16] %v506, 128
        %931 = vxpose.xlu0.b32.end [16/16] %v509, 128
        %v932 = vpop.trf.xlu0
        %v933 = vpop.trf.xlu0
        %v934 = vpop.trf.xlu0
        %v935 = vpop.trf.xlu0
        %v936 = vpop.trf.xlu0
        %v937 = vpop.trf.xlu0
        %v938 = vpop.trf.xlu0
        %v939 = vpop.trf.xlu0
        %v940 = vpop.trf.xlu0
        %v941 = vpop.trf.xlu0
        %v942 = vpop.trf.xlu0
        %v943 = vpop.trf.xlu0
        %v944 = vpop.trf.xlu0
        %v945 = vpop.trf.xlu0
        %v946 = vpop.trf.xlu0
        %v947 = vpop.trf.xlu0
        %948 = vxpose.xlu0.b32.start [1/16] %v465, 128
        %949 = vxpose.xlu0.b32.cont [2/16] %v468, 128
        %950 = vxpose.xlu0.b32.cont [3/16] %v471, 128
        %951 = vxpose.xlu0.b32.cont [4/16] %v474, 128
        %952 = vxpose.xlu0.b32.cont [5/16] %v477, 128
        %953 = vxpose.xlu0.b32.cont [6/16] %v480, 128
        %954 = vxpose.xlu0.b32.cont [7/16] %v483, 128
        %955 = vxpose.xlu0.b32.cont [8/16] %v486, 128
        %956 = vxpose.xlu0.b32.cont [9/16] %v489, 128
        %957 = vxpose.xlu0.b32.cont [10/16] %v492, 128
        %958 = vxpose.xlu0.b32.cont [11/16] %v495, 128
        %959 = vxpose.xlu0.b32.cont [12/16] %v498, 128
        %960 = vxpose.xlu0.b32.cont [13/16] %v501, 128
        %961 = vxpose.xlu0.b32.cont [14/16] %v504, 128
        %962 = vxpose.xlu0.b32.cont [15/16] %v507, 128
        %963 = vxpose.xlu0.b32.end [16/16] %v510, 128
        %v964 = vpop.trf.xlu0
        %v965 = vpop.trf.xlu0
        %v966 = vpop.trf.xlu0
        %v967 = vpop.trf.xlu0
        %v968 = vpop.trf.xlu0
        %v969 = vpop.trf.xlu0
        %v970 = vpop.trf.xlu0
        %v971 = vpop.trf.xlu0
        %v972 = vpop.trf.xlu0
        %v973 = vpop.trf.xlu0
        %v974 = vpop.trf.xlu0
        %v975 = vpop.trf.xlu0
        %v976 = vpop.trf.xlu0
        %v977 = vpop.trf.xlu0
        %v978 = vpop.trf.xlu0
        %v979 = vpop.trf.xlu0
        %980 = vxpose.xlu0.b32.start [1/16] %v511, 128
        %981 = vxpose.xlu0.b32.cont [2/16] %v514, 128
        %982 = vxpose.xlu0.b32.cont [3/16] %v517, 128
        %983 = vxpose.xlu0.b32.cont [4/16] %v520, 128
        %984 = vxpose.xlu0.b32.cont [5/16] %v523, 128
        %985 = vxpose.xlu0.b32.cont [6/16] %v526, 128
        %986 = vxpose.xlu0.b32.cont [7/16] %v529, 128
        %987 = vxpose.xlu0.b32.cont [8/16] %v532, 128
        %988 = vxpose.xlu0.b32.cont [9/16] %v535, 128
        %989 = vxpose.xlu0.b32.cont [10/16] %v538, 128
        %990 = vxpose.xlu0.b32.cont [11/16] %v541, 128
        %991 = vxpose.xlu0.b32.cont [12/16] %v544, 128
        %992 = vxpose.xlu0.b32.cont [13/16] %v547, 128
        %993 = vxpose.xlu0.b32.cont [14/16] %v550, 128
        %994 = vxpose.xlu0.b32.cont [15/16] %v553, 128
        %995 = vxpose.xlu0.b32.end [16/16] %v556, 128
        %v996 = vpop.trf.xlu0
        %v997 = vpop.trf.xlu0
        %v998 = vpop.trf.xlu0
        %v999 = vpop.trf.xlu0
        %v1000 = vpop.trf.xlu0
        %v1001 = vpop.trf.xlu0
        %v1002 = vpop.trf.xlu0
        %v1003 = vpop.trf.xlu0
        %v1004 = vpop.trf.xlu0
        %v1005 = vpop.trf.xlu0
        %v1006 = vpop.trf.xlu0
        %v1007 = vpop.trf.xlu0
        %v1008 = vpop.trf.xlu0
        %v1009 = vpop.trf.xlu0
        %v1010 = vpop.trf.xlu0
        %v1011 = vpop.trf.xlu0
        %1012 = vxpose.xlu0.b32.start [1/16] %v512, 128
        %1013 = vxpose.xlu0.b32.cont [2/16] %v515, 128
        %1014 = vxpose.xlu0.b32.cont [3/16] %v518, 128
        %1015 = vxpose.xlu0.b32.cont [4/16] %v521, 128
        %1016 = vxpose.xlu0.b32.cont [5/16] %v524, 128
        %1017 = vxpose.xlu0.b32.cont [6/16] %v527, 128
        %1018 = vxpose.xlu0.b32.cont [7/16] %v530, 128
        %1019 = vxpose.xlu0.b32.cont [8/16] %v533, 128
        %1020 = vxpose.xlu0.b32.cont [9/16] %v536, 128
        %1021 = vxpose.xlu0.b32.cont [10/16] %v539, 128
        %1022 = vxpose.xlu0.b32.cont [11/16] %v542, 128
        %1023 = vxpose.xlu0.b32.cont [12/16] %v545, 128
        %1024 = vxpose.xlu0.b32.cont [13/16] %v548, 128
        %1025 = vxpose.xlu0.b32.cont [14/16] %v551, 128
        %1026 = vxpose.xlu0.b32.cont [15/16] %v554, 128
        %1027 = vxpose.xlu0.b32.end [16/16] %v557, 128
        %v1028 = vpop.trf.xlu0
        %v1029 = vpop.trf.xlu0
        %v1030 = vpop.trf.xlu0
        %v1031 = vpop.trf.xlu0
        %v1032 = vpop.trf.xlu0
        %v1033 = vpop.trf.xlu0
        %v1034 = vpop.trf.xlu0
        %v1035 = vpop.trf.xlu0
        %v1036 = vpop.trf.xlu0
        %v1037 = vpop.trf.xlu0
        %v1038 = vpop.trf.xlu0
        %v1039 = vpop.trf.xlu0
        %v1040 = vpop.trf.xlu0
        %v1041 = vpop.trf.xlu0
        %v1042 = vpop.trf.xlu0
        %v1043 = vpop.trf.xlu0
        %1044 = vxpose.xlu0.b32.start [1/16] %v513, 128
        %1045 = vxpose.xlu0.b32.cont [2/16] %v516, 128
        %1046 = vxpose.xlu0.b32.cont [3/16] %v519, 128
        %1047 = vxpose.xlu0.b32.cont [4/16] %v522, 128
        %1048 = vxpose.xlu0.b32.cont [5/16] %v525, 128
        %1049 = vxpose.xlu0.b32.cont [6/16] %v528, 128
        %1050 = vxpose.xlu0.b32.cont [7/16] %v531, 128
        %1051 = vxpose.xlu0.b32.cont [8/16] %v534, 128
        %1052 = vxpose.xlu0.b32.cont [9/16] %v537, 128
        %1053 = vxpose.xlu0.b32.cont [10/16] %v540, 128
        %1054 = vxpose.xlu0.b32.cont [11/16] %v543, 128
        %1055 = vxpose.xlu0.b32.cont [12/16] %v546, 128
        %1056 = vxpose.xlu0.b32.cont [13/16] %v549, 128
        %1057 = vxpose.xlu0.b32.cont [14/16] %v552, 128
        %1058 = vxpose.xlu0.b32.cont [15/16] %v555, 128
        %1059 = vxpose.xlu0.b32.end [16/16] %v558, 128
        %v1060 = vpop.trf.xlu0
        %v1061 = vpop.trf.xlu0
        %v1062 = vpop.trf.xlu0
        %v1063 = vpop.trf.xlu0
        %v1064 = vpop.trf.xlu0
        %v1065 = vpop.trf.xlu0
        %v1066 = vpop.trf.xlu0
        %v1067 = vpop.trf.xlu0
        %v1068 = vpop.trf.xlu0
        %v1069 = vpop.trf.xlu0
        %v1070 = vpop.trf.xlu0
        %v1071 = vpop.trf.xlu0
        %v1072 = vpop.trf.xlu0
        %v1073 = vpop.trf.xlu0
        %v1074 = vpop.trf.xlu0
        %v1075 = vpop.trf.xlu0
        %1076 = vmatprep.subr.mxu0 0.0
        %1077 = vmatpush1.msra.mxu0 %v788
        %1078 = vmatprep.subr.mxu0 0.0
        %1079 = vmatpush1.msra.mxu0 %v789
        %1080 = vmatprep.subr.mxu0 0.0
        %1081 = vmatpush1.msra.mxu0 %v790
        %1082 = vmatprep.subr.mxu0 0.0
        %1083 = vmatpush1.msra.mxu0 %v791
        %1084 = vmatprep.subr.mxu0 0.0
        %1085 = vmatpush1.msra.mxu0 %v792
        %1086 = vmatprep.subr.mxu0 0.0
        %1087 = vmatpush1.msra.mxu0 %v793
        %1088 = vmatprep.subr.mxu0 0.0
        %1089 = vmatpush1.msra.mxu0 %v794
        %1090 = vmatprep.subr.mxu0 0.0
        %1091 = vmatpush1.msra.mxu0 %v795
        %1092 = vmatprep.subr.mxu0 0.0
        %1093 = vmatpush1.msra.mxu0 %v796
        %1094 = vmatprep.subr.mxu0 0.0
        %1095 = vmatpush1.msra.mxu0 %v797
        %1096 = vmatprep.subr.mxu0 0.0
        %1097 = vmatpush1.msra.mxu0 %v798
        %1098 = vmatprep.subr.mxu0 0.0
        %1099 = vmatpush1.msra.mxu0 %v799
        %1100 = vmatprep.subr.mxu0 0.0
        %1101 = vmatpush1.msra.mxu0 %v800
        %1102 = vmatprep.subr.mxu0 0.0
        %1103 = vmatpush1.msra.mxu0 %v801
        %1104 = vmatprep.subr.mxu0 0.0
        %1105 = vmatpush1.msra.mxu0 %v802
        %1106 = vmatprep.subr.mxu0 0.0
        %1107 = vmatpush1.msra.mxu0 %v803
        %1108 = vmatprep.subr.mxu0 0.0
        %1109 = vmatpush1.msra.mxu0 %v820
        %1110 = vmatprep.subr.mxu0 0.0
        %1111 = vmatpush1.msra.mxu0 %v821
        %1112 = vmatprep.subr.mxu0 0.0
        %1113 = vmatpush1.msra.mxu0 %v822
        %1114 = vmatprep.subr.mxu0 0.0
        %1115 = vmatpush1.msra.mxu0 %v823
        %1116 = vmatprep.subr.mxu0 0.0
        %1117 = vmatpush1.msra.mxu0 %v824
        %1118 = vmatprep.subr.mxu0 0.0
        %1119 = vmatpush1.msra.mxu0 %v825
        %1120 = vmatprep.subr.mxu0 0.0
        %1121 = vmatpush1.msra.mxu0 %v826
        %1122 = vmatprep.subr.mxu0 0.0
        %1123 = vmatpush1.msra.mxu0 %v827
        %1124 = vmatprep.subr.mxu0 0.0
        %1125 = vmatpush1.msra.mxu0 %v828
        %1126 = vmatprep.subr.mxu0 0.0
        %1127 = vmatpush1.msra.mxu0 %v829
        %1128 = vmatprep.subr.mxu0 0.0
        %1129 = vmatpush1.msra.mxu0 %v830
        %1130 = vmatprep.subr.mxu0 0.0
        %1131 = vmatpush1.msra.mxu0 %v831
        %1132 = vmatprep.subr.mxu0 0.0
        %1133 = vmatpush1.msra.mxu0 %v832
        %1134 = vmatprep.subr.mxu0 0.0
        %1135 = vmatpush1.msra.mxu0 %v833
        %1136 = vmatprep.subr.mxu0 0.0
        %1137 = vmatpush1.msra.mxu0 %v834
        %1138 = vmatprep.subr.mxu0 0.0
        %1139 = vmatpush1.msra.mxu0 %v835
        %1140 = vmatprep.mubr.f32.mxu0 %v996
        %1141 = vmatmul.mubr.f32.gmra.mrb[0].mxu0 %v900
        %v1142 = vpop.f32.mrb[0].mxu0
        %v1143 = vadd.f32 0.0, %v1142
        %v1144 = vpop.f32.mrb[0].mxu0
        %1145 = vmatprep.mubr.f32.mxu0 %v997
        %1146 = vmatmul.mubr.f32.gmra.mrb[0].mxu0 %v901
        %v1147 = vpop.f32.mrb[0].mxu0
        %v1148 = vadd.f32 0.0, %v1147
        %v1149 = vpop.f32.mrb[0].mxu0
        %1150 = vmatprep.mubr.f32.mxu0 %v998
        %1151 = vmatmul.mubr.f32.gmra.mrb[0].mxu0 %v902
        %v1152 = vpop.f32.mrb[0].mxu0
        %v1153 = vadd.f32 0.0, %v1152
        %v1154 = vpop.f32.mrb[0].mxu0
        %1155 = vmatprep.mubr.f32.mxu0 %v999
        %1156 = vmatmul.mubr.f32.gmra.mrb[0].mxu0 %v903
        %v1157 = vpop.f32.mrb[0].mxu0
        %v1158 = vadd.f32 0.0, %v1157
        %v1159 = vpop.f32.mrb[0].mxu0
        %1160 = vmatprep.mubr.f32.mxu0 %v1000
        %1161 = vmatmul.mubr.f32.gmra.mrb[0].mxu0 %v904
        %v1162 = vpop.f32.mrb[0].mxu0
        %v1163 = vadd.f32 0.0, %v1162
        %v1164 = vpop.f32.mrb[0].mxu0
        %1165 = vmatprep.mubr.f32.mxu0 %v1001
        %1166 = vmatmul.mubr.f32.gmra.mrb[0].mxu0 %v905
        %v1167 = vpop.f32.mrb[0].mxu0
        %v1168 = vadd.f32 0.0, %v1167
        %v1169 = vpop.f32.mrb[0].mxu0
        %1170 = vmatprep.mubr.f32.mxu0 %v1002
        %1171 = vmatmul.mubr.f32.gmra.mrb[0].mxu0 %v906
        %v1172 = vpop.f32.mrb[0].mxu0
        %v1173 = vadd.f32 0.0, %v1172
        %v1174 = vpop.f32.mrb[0].mxu0
        %1175 = vmatprep.mubr.f32.mxu0 %v1003
        %1176 = vmatmul.mubr.f32.gmra.mrb[0].mxu0 %v907
        %v1177 = vpop.f32.mrb[0].mxu0
        %v1178 = vadd.f32 0.0, %v1177
        %v1179 = vpop.f32.mrb[0].mxu0
        %1180 = vmatprep.mubr.f32.mxu0 %v1004
        %1181 = vmatmul.mubr.f32.gmra.mrb[0].mxu0 %v908
        %v1182 = vpop.f32.mrb[0].mxu0
        %v1183 = vadd.f32 0.0, %v1182
        %v1184 = vpop.f32.mrb[0].mxu0
        %1185 = vmatprep.mubr.f32.mxu0 %v1005
        %1186 = vmatmul.mubr.f32.gmra.mrb[0].mxu0 %v909
        %v1187 = vpop.f32.mrb[0].mxu0
        %v1188 = vadd.f32 0.0, %v1187
        %v1189 = vpop.f32.mrb[0].mxu0
        %1190 = vmatprep.mubr.f32.mxu0 %v1006
        %1191 = vmatmul.mubr.f32.gmra.mrb[0].mxu0 %v910
        %v1192 = vpop.f32.mrb[0].mxu0
        %v1193 = vadd.f32 0.0, %v1192
        %v1194 = vpop.f32.mrb[0].mxu0
        %1195 = vmatprep.mubr.f32.mxu0 %v1007
        %1196 = vmatmul.mubr.f32.gmra.mrb[0].mxu0 %v911
        %v1197 = vpop.f32.mrb[0].mxu0
        %v1198 = vadd.f32 0.0, %v1197
        %v1199 = vpop.f32.mrb[0].mxu0
        %1200 = vmatprep.mubr.f32.mxu0 %v1008
        %1201 = vmatmul.mubr.f32.gmra.mrb[0].mxu0 %v912
        %v1202 = vpop.f32.mrb[0].mxu0
        %v1203 = vadd.f32 0.0, %v1202
        %v1204 = vpop.f32.mrb[0].mxu0
        %1205 = vmatprep.mubr.f32.mxu0 %v1009
        %1206 = vmatmul.mubr.f32.gmra.mrb[0].mxu0 %v913
        %v1207 = vpop.f32.mrb[0].mxu0
        %v1208 = vadd.f32 0.0, %v1207
        %v1209 = vpop.f32.mrb[0].mxu0
        %1210 = vmatprep.mubr.f32.mxu0 %v1010
        %1211 = vmatmul.mubr.f32.gmra.mrb[0].mxu0 %v914
        %v1212 = vpop.f32.mrb[0].mxu0
        %v1213 = vadd.f32 0.0, %v1212
        %v1214 = vpop.f32.mrb[0].mxu0
        %1215 = vmatprep.mubr.f32.mxu0 %v1011
        %1216 = vmatmul.mubr.f32.gmra.mrb[0].mxu0 %v915
        %v1217 = vpop.f32.mrb[0].mxu0
        %v1218 = vadd.f32 0.0, %v1217
        %v1219 = vpop.f32.mrb[0].mxu0
        %1220 = vmatprep.mubr.f32.mxu0 %v1028
        %1221 = vmatmul.mubr.f32.gmra.mrb[0].mxu0 %v932
        %v1222 = vpop.f32.mrb[0].mxu0
        %v1223 = vadd.f32 0.0, %v1222
        %v1224 = vpop.f32.mrb[0].mxu0
        %1225 = vmatprep.mubr.f32.mxu0 %v1029
        %1226 = vmatmul.mubr.f32.gmra.mrb[0].mxu0 %v933
        %v1227 = vpop.f32.mrb[0].mxu0
        %v1228 = vadd.f32 0.0, %v1227
        %v1229 = vpop.f32.mrb[0].mxu0
        %1230 = vmatprep.mubr.f32.mxu0 %v1030
        %1231 = vmatmul.mubr.f32.gmra.mrb[0].mxu0 %v934
        %v1232 = vpop.f32.mrb[0].mxu0
        %v1233 = vadd.f32 0.0, %v1232
        %v1234 = vpop.f32.mrb[0].mxu0
        %1235 = vmatprep.mubr.f32.mxu0 %v1031
        %1236 = vmatmul.mubr.f32.gmra.mrb[0].mxu0 %v935
        %v1237 = vpop.f32.mrb[0].mxu0
        %v1238 = vadd.f32 0.0, %v1237
        %v1239 = vpop.f32.mrb[0].mxu0
        %1240 = vmatprep.mubr.f32.mxu0 %v1032
        %1241 = vmatmul.mubr.f32.gmra.mrb[0].mxu0 %v936
        %v1242 = vpop.f32.mrb[0].mxu0
        %v1243 = vadd.f32 0.0, %v1242
        %v1244 = vpop.f32.mrb[0].mxu0
        %1245 = vmatprep.mubr.f32.mxu0 %v1033
        %1246 = vmatmul.mubr.f32.gmra.mrb[0].mxu0 %v937
        %v1247 = vpop.f32.mrb[0].mxu0
        %v1248 = vadd.f32 0.0, %v1247
        %v1249 = vpop.f32.mrb[0].mxu0
        %1250 = vmatprep.mubr.f32.mxu0 %v1034
        %1251 = vmatmul.mubr.f32.gmra.mrb[0].mxu0 %v938
        %v1252 = vpop.f32.mrb[0].mxu0
        %v1253 = vadd.f32 0.0, %v1252
        %v1254 = vpop.f32.mrb[0].mxu0
        %1255 = vmatprep.mubr.f32.mxu0 %v1035
        %1256 = vmatmul.mubr.f32.gmra.mrb[0].mxu0 %v939
        %v1257 = vpop.f32.mrb[0].mxu0
        %v1258 = vadd.f32 0.0, %v1257
        %v1259 = vpop.f32.mrb[0].mxu0
        %1260 = vmatprep.mubr.f32.mxu0 %v1036
        %1261 = vmatmul.mubr.f32.gmra.mrb[0].mxu0 %v940
        %v1262 = vpop.f32.mrb[0].mxu0
        %v1263 = vadd.f32 0.0, %v1262
        %v1264 = vpop.f32.mrb[0].mxu0
        %1265 = vmatprep.mubr.f32.mxu0 %v1037
        %1266 = vmatmul.mubr.f32.gmra.mrb[0].mxu0 %v941
        %v1267 = vpop.f32.mrb[0].mxu0
        %v1268 = vadd.f32 0.0, %v1267
        %v1269 = vpop.f32.mrb[0].mxu0
        %1270 = vmatprep.mubr.f32.mxu0 %v1038
        %1271 = vmatmul.mubr.f32.gmra.mrb[0].mxu0 %v942
        %v1272 = vpop.f32.mrb[0].mxu0
        %v1273 = vadd.f32 0.0, %v1272
        %v1274 = vpop.f32.mrb[0].mxu0
        %1275 = vmatprep.mubr.f32.mxu0 %v1039
        %1276 = vmatmul.mubr.f32.gmra.mrb[0].mxu0 %v943
        %v1277 = vpop.f32.mrb[0].mxu0
        %v1278 = vadd.f32 0.0, %v1277
        %v1279 = vpop.f32.mrb[0].mxu0
        %1280 = vmatprep.mubr.f32.mxu0 %v1040
        %1281 = vmatmul.mubr.f32.gmra.mrb[0].mxu0 %v944
        %v1282 = vpop.f32.mrb[0].mxu0
        %v1283 = vadd.f32 0.0, %v1282
        %v1284 = vpop.f32.mrb[0].mxu0
        %1285 = vmatprep.mubr.f32.mxu0 %v1041
        %1286 = vmatmul.mubr.f32.gmra.mrb[0].mxu0 %v945
        %v1287 = vpop.f32.mrb[0].mxu0
        %v1288 = vadd.f32 0.0, %v1287
        %v1289 = vpop.f32.mrb[0].mxu0
        %1290 = vmatprep.mubr.f32.mxu0 %v1042
        %1291 = vmatmul.mubr.f32.gmra.mrb[0].mxu0 %v946
        %v1292 = vpop.f32.mrb[0].mxu0
        %v1293 = vadd.f32 0.0, %v1292
        %v1294 = vpop.f32.mrb[0].mxu0
        %1295 = vmatprep.mubr.f32.mxu0 %v1043
        %1296 = vmatmul.mubr.f32.gmra.mrb[0].mxu0 %v947
        %v1297 = vpop.f32.mrb[0].mxu0
        %v1298 = vadd.f32 0.0, %v1297
        %v1299 = vpop.f32.mrb[0].mxu0
        %1300 = vmatprep.mubr.f32.mxu0 %v1060
        %1301 = vmatmul.mubr.f32.gmra.mrb[0].mxu0 %v964
        %v1302 = vpop.f32.mrb[0].mxu0
        %v1303 = vadd.f32 0.0, %v1302
        %v1304 = vpop.f32.mrb[0].mxu0
        %1305 = vmatprep.mubr.f32.mxu0 %v1061
        %1306 = vmatmul.mubr.f32.gmra.mrb[0].mxu0 %v965
        %v1307 = vpop.f32.mrb[0].mxu0
        %v1308 = vadd.f32 0.0, %v1307
        %v1309 = vpop.f32.mrb[0].mxu0
        %1310 = vmatprep.mubr.f32.mxu0 %v1062
        %1311 = vmatmul.mubr.f32.gmra.mrb[0].mxu0 %v966
        %v1312 = vpop.f32.mrb[0].mxu0
        %v1313 = vadd.f32 0.0, %v1312
        %v1314 = vpop.f32.mrb[0].mxu0
        %1315 = vmatprep.mubr.f32.mxu0 %v1063
        %1316 = vmatmul.mubr.f32.gmra.mrb[0].mxu0 %v967
        %v1317 = vpop.f32.mrb[0].mxu0
        %v1318 = vadd.f32 0.0, %v1317
        %v1319 = vpop.f32.mrb[0].mxu0
        %1320 = vmatprep.mubr.f32.mxu0 %v1064
        %1321 = vmatmul.mubr.f32.gmra.mrb[0].mxu0 %v968
        %v1322 = vpop.f32.mrb[0].mxu0
        %v1323 = vadd.f32 0.0, %v1322
        %v1324 = vpop.f32.mrb[0].mxu0
        %1325 = vmatprep.mubr.f32.mxu0 %v1065
        %1326 = vmatmul.mubr.f32.gmra.mrb[0].mxu0 %v969
        %v1327 = vpop.f32.mrb[0].mxu0
        %v1328 = vadd.f32 0.0, %v1327
        %v1329 = vpop.f32.mrb[0].mxu0
        %1330 = vmatprep.mubr.f32.mxu0 %v1066
        %1331 = vmatmul.mubr.f32.gmra.mrb[0].mxu0 %v970
        %v1332 = vpop.f32.mrb[0].mxu0
        %v1333 = vadd.f32 0.0, %v1332
        %v1334 = vpop.f32.mrb[0].mxu0
        %1335 = vmatprep.mubr.f32.mxu0 %v1067
        %1336 = vmatmul.mubr.f32.gmra.mrb[0].mxu0 %v971
        %v1337 = vpop.f32.mrb[0].mxu0
        %v1338 = vadd.f32 0.0, %v1337
        %v1339 = vpop.f32.mrb[0].mxu0
        %1340 = vmatprep.mubr.f32.mxu0 %v1068
        %1341 = vmatmul.mubr.f32.gmra.mrb[0].mxu0 %v972
        %v1342 = vpop.f32.mrb[0].mxu0
        %v1343 = vadd.f32 0.0, %v1342
        %v1344 = vpop.f32.mrb[0].mxu0
        %1345 = vmatprep.mubr.f32.mxu0 %v1069
        %1346 = vmatmul.mubr.f32.gmra.mrb[0].mxu0 %v973
        %v1347 = vpop.f32.mrb[0].mxu0
        %v1348 = vadd.f32 0.0, %v1347
        %v1349 = vpop.f32.mrb[0].mxu0
        %1350 = vmatprep.mubr.f32.mxu0 %v1070
        %1351 = vmatmul.mubr.f32.gmra.mrb[0].mxu0 %v974
        %v1352 = vpop.f32.mrb[0].mxu0
        %v1353 = vadd.f32 0.0, %v1352
        %v1354 = vpop.f32.mrb[0].mxu0
        %1355 = vmatprep.mubr.f32.mxu0 %v1071
        %1356 = vmatmul.mubr.f32.gmra.mrb[0].mxu0 %v975
        %v1357 = vpop.f32.mrb[0].mxu0
        %v1358 = vadd.f32 0.0, %v1357
        %v1359 = vpop.f32.mrb[0].mxu0
        %1360 = vmatprep.mubr.f32.mxu0 %v1072
        %1361 = vmatmul.mubr.f32.gmra.mrb[0].mxu0 %v976
        %v1362 = vpop.f32.mrb[0].mxu0
        %v1363 = vadd.f32 0.0, %v1362
        %v1364 = vpop.f32.mrb[0].mxu0
        %1365 = vmatprep.mubr.f32.mxu0 %v1073
        %1366 = vmatmul.mubr.f32.gmra.mrb[0].mxu0 %v977
        %v1367 = vpop.f32.mrb[0].mxu0
        %v1368 = vadd.f32 0.0, %v1367
        %v1369 = vpop.f32.mrb[0].mxu0
        %1370 = vmatprep.mubr.f32.mxu0 %v1074
        %1371 = vmatmul.mubr.f32.gmra.mrb[0].mxu0 %v978
        %v1372 = vpop.f32.mrb[0].mxu0
        %v1373 = vadd.f32 0.0, %v1372
        %v1374 = vpop.f32.mrb[0].mxu0
        %1375 = vmatprep.mubr.f32.mxu0 %v1075
        %1376 = vmatmul.mubr.f32.gmra.mrb[0].mxu0 %v979
        %v1377 = vpop.f32.mrb[0].mxu0
        %v1378 = vadd.f32 0.0, %v1377
        %v1379 = vpop.f32.mrb[0].mxu0
        %1380 = vdwg.mxu0
        %v1381 = vadd.f32 %v836, %v1143
        %v1382 = vadd.f32 %v837, %v1148
        %v1383 = vadd.f32 %v838, %v1153
        %v1384 = vadd.f32 %v839, %v1158
        %v1385 = vadd.f32 %v840, %v1163
        %v1386 = vadd.f32 %v841, %v1168
        %v1387 = vadd.f32 %v842, %v1173
        %v1388 = vadd.f32 %v843, %v1178
        %v1389 = vadd.f32 %v844, %v1183
        %v1390 = vadd.f32 %v845, %v1188
        %v1391 = vadd.f32 %v846, %v1193
        %v1392 = vadd.f32 %v847, %v1198
        %v1393 = vadd.f32 %v848, %v1203
        %v1394 = vadd.f32 %v849, %v1208
        %v1395 = vadd.f32 %v850, %v1213
        %v1396 = vadd.f32 %v851, %v1218
        %v1397 = vadd.f32 %v852, %v1223
        %v1398 = vadd.f32 %v853, %v1228
        %v1399 = vadd.f32 %v854, %v1233
        %v1400 = vadd.f32 %v855, %v1238
        %v1401 = vadd.f32 %v856, %v1243
        %v1402 = vadd.f32 %v857, %v1248
        %v1403 = vadd.f32 %v858, %v1253
        %v1404 = vadd.f32 %v859, %v1258
        %v1405 = vadd.f32 %v860, %v1263
        %v1406 = vadd.f32 %v861, %v1268
        %v1407 = vadd.f32 %v862, %v1273
        %v1408 = vadd.f32 %v863, %v1278
        %v1409 = vadd.f32 %v864, %v1283
        %v1410 = vadd.f32 %v865, %v1288
        %v1411 = vadd.f32 %v866, %v1293
        %v1412 = vadd.f32 %v867, %v1298
        %v1413 = vadd.f32 %v868, %v1303
        %v1414 = vadd.f32 %v869, %v1308
        %v1415 = vadd.f32 %v870, %v1313
        %v1416 = vadd.f32 %v871, %v1318
        %v1417 = vadd.f32 %v872, %v1323
        %v1418 = vadd.f32 %v873, %v1328
        %v1419 = vadd.f32 %v874, %v1333
        %v1420 = vadd.f32 %v875, %v1338
        %v1421 = vadd.f32 %v876, %v1343
        %v1422 = vadd.f32 %v877, %v1348
        %v1423 = vadd.f32 %v878, %v1353
        %v1424 = vadd.f32 %v879, %v1358
        %v1425 = vadd.f32 %v880, %v1363
        %v1426 = vadd.f32 %v881, %v1368
        %v1427 = vadd.f32 %v882, %v1373
        %v1428 = vadd.f32 %v883, %v1378
        %1429 = vst [vmem:[#allocation4] sm:$0xff] %v1381
        %1430 = vst [vmem:[#allocation4 + $0x8] sm:$0xff] %v1382
        %1431 = vst [vmem:[#allocation4 + $0x10] sm:$0xff] %v1383
        %1432 = vst [vmem:[#allocation4 + $0x18] sm:$0xff] %v1384
        %1433 = vst [vmem:[#allocation4 + $0x20] sm:$0xff] %v1385
        %1434 = vst [vmem:[#allocation4 + $0x28] sm:$0xff] %v1386
        %1435 = vst [vmem:[#allocation4 + $0x30] sm:$0xff] %v1387
        %1436 = vst [vmem:[#allocation4 + $0x38] sm:$0xff] %v1388
        %1437 = vst [vmem:[#allocation4 + $0x40] sm:$0xff] %v1389
        %1438 = vst [vmem:[#allocation4 + $0x48] sm:$0xff] %v1390
        %1439 = vst [vmem:[#allocation4 + $0x50] sm:$0xff] %v1391
        %1440 = vst [vmem:[#allocation4 + $0x58] sm:$0xff] %v1392
        %1441 = vst [vmem:[#allocation4 + $0x60] sm:$0xff] %v1393
        %1442 = vst [vmem:[#allocation4 + $0x68] sm:$0xff] %v1394
        %1443 = vst [vmem:[#allocation4 + $0x70] sm:$0xff] %v1395
        %1444 = vst [vmem:[#allocation4 + $0x78] sm:$0xff] %v1396
        %1445 = vst [vmem:[#allocation4 + $0x80] sm:$0xff] %v1397
        %1446 = vst [vmem:[#allocation4 + $0x88] sm:$0xff] %v1398
        %1447 = vst [vmem:[#allocation4 + $0x90] sm:$0xff] %v1399
        %1448 = vst [vmem:[#allocation4 + $0x98] sm:$0xff] %v1400
        %1449 = vst [vmem:[#allocation4 + $0xa0] sm:$0xff] %v1401
        %1450 = vst [vmem:[#allocation4 + $0xa8] sm:$0xff] %v1402
        %1451 = vst [vmem:[#allocation4 + $0xb0] sm:$0xff] %v1403
        %1452 = vst [vmem:[#allocation4 + $0xb8] sm:$0xff] %v1404
        %1453 = vst [vmem:[#allocation4 + $0xc0] sm:$0xff] %v1405
        %1454 = vst [vmem:[#allocation4 + $0xc8] sm:$0xff] %v1406
        %1455 = vst [vmem:[#allocation4 + $0xd0] sm:$0xff] %v1407
        %1456 = vst [vmem:[#allocation4 + $0xd8] sm:$0xff] %v1408
        %1457 = vst [vmem:[#allocation4 + $0xe0] sm:$0xff] %v1409
        %1458 = vst [vmem:[#allocation4 + $0xe8] sm:$0xff] %v1410
        %1459 = vst [vmem:[#allocation4 + $0xf0] sm:$0xff] %v1411
        %1460 = vst [vmem:[#allocation4 + $0xf8] sm:$0xff] %v1412
        %1461 = vst [vmem:[#allocation4 + $0x100] sm:$0xff] %v1413
        %1462 = vst [vmem:[#allocation4 + $0x108] sm:$0xff] %v1414
        %1463 = vst [vmem:[#allocation4 + $0x110] sm:$0xff] %v1415
        %1464 = vst [vmem:[#allocation4 + $0x118] sm:$0xff] %v1416
        %1465 = vst [vmem:[#allocation4 + $0x120] sm:$0xff] %v1417
        %1466 = vst [vmem:[#allocation4 + $0x128] sm:$0xff] %v1418
        %1467 = vst [vmem:[#allocation4 + $0x130] sm:$0xff] %v1419
        %1468 = vst [vmem:[#allocation4 + $0x138] sm:$0xff] %v1420
        %1469 = vst [vmem:[#allocation4 + $0x140] sm:$0xff] %v1421
        %1470 = vst [vmem:[#allocation4 + $0x148] sm:$0xff] %v1422
        %1471 = vst [vmem:[#allocation4 + $0x150] sm:$0xff] %v1423
        %1472 = vst [vmem:[#allocation4 + $0x158] sm:$0xff] %v1424
        %1473 = vst [vmem:[#allocation4 + $0x160] sm:$0xff] %v1425
        %1474 = vst [vmem:[#allocation4 + $0x168] sm:$0xff] %v1426
        %1475 = vst [vmem:[#allocation4 + $0x170] sm:$0xff] %v1427
        %1476 = vst [vmem:[#allocation4 + $0x178] sm:$0xff] %v1428
        %p1477 = scmp.eq.s32.totalorder %s27, 1
        // Predicated region
        $region41: #{tpu_custom_call.1} parent=27 // pred_check
          %p1478 = pneg %p1477
        $region42: #{tpu_custom_call.1} parent=27 // pred_check_branch
          %1480 = sbr.rel (%p1478) target = $region44
        $region43: #{tpu_custom_call.1} parent=27 // pred_region
          %s1481 = scalar_lea.vmem [#allocation2], %s750
          %v1482 = vld [vmem:[%s1481] sm:$0x1]
          %s1483 = scalar_lea.vmem [#allocation3], %s750
          %v1484 = vld [vmem:[%s1483] sm:$0x1]
          %v1485 = vsub.f32 %v1482, %v1484
          %v1486 = vmul.f32 %v1485, %v1485
          %vm1487 = vcmask 1040384
          %v1488 = vsel %vm1487, %v1486, 0.0
          %1489 = vadd.xlane.f32.xlu0 %v1488
          %v1490 = vpop.xlane.xlu0 %1489
          %v1491 = vrot.slane %v1490, 4
          %v1492 = vadd.f32 %v1490, %v1491
          %v1493 = vrot.slane %v1492, 2
          %v1494 = vadd.f32 %v1492, %v1493
          %v1495 = vrot.slane %v1494, 1
          %v1496 = vadd.f32 %v1494, %v1495
          %s1497 = vtos %v1496
          %s1498 = smul.f32 %s1497, 6.510417e-08
          loop: start=0, step=1, limit=3
          $region45: #{tpu_custom_call.1} parent=43 // loop_pre_header
            _
          $region46: #{tpu_custom_call.1} parent=43 // loop_header
            %s1500 = sphi 0, %s1504
            %p1501 = scmp.ge.s32.totalorder %s1500, 3
            %s1505 = sphi 0.0, %s2075
          $region47: #{tpu_custom_call.1} parent=43 // loop_header_branch
            %1503 = sbr.rel (%p1501) target = $region51
          $region48: #{tpu_custom_call.1} parent=43 // loop_body
            %s1506 = smul.u32 %s1500, 128
            %s1507 = scalar_lea.vmem [#allocation4], %s1506
            %v1508 = vld [vmem:[%s1507] sm:$0xff]
            %v1509 = vld [vmem:[%s1507 + $0x8] sm:$0xff]
            %v1510 = vld [vmem:[%s1507 + $0x10] sm:$0xff]
            %v1511 = vld [vmem:[%s1507 + $0x18] sm:$0xff]
            %v1512 = vld [vmem:[%s1507 + $0x20] sm:$0xff]
            %v1513 = vld [vmem:[%s1507 + $0x28] sm:$0xff]
            %v1514 = vld [vmem:[%s1507 + $0x30] sm:$0xff]
            %v1515 = vld [vmem:[%s1507 + $0x38] sm:$0xff]
            %v1516 = vld [vmem:[%s1507 + $0x40] sm:$0xff]
            %v1517 = vld [vmem:[%s1507 + $0x48] sm:$0xff]
            %v1518 = vld [vmem:[%s1507 + $0x50] sm:$0xff]
            %v1519 = vld [vmem:[%s1507 + $0x58] sm:$0xff]
            %v1520 = vld [vmem:[%s1507 + $0x60] sm:$0xff]
            %v1521 = vld [vmem:[%s1507 + $0x68] sm:$0xff]
            %v1522 = vld [vmem:[%s1507 + $0x70] sm:$0xff]
            %v1523 = vld [vmem:[%s1507 + $0x78] sm:$0xff]
            %s1524 = sshra.s32 %s1506, 7
            %s1525 = sand.u32 %s1506, 127
            %s1526 = scalar_lea.vmem [#allocation2], %s1524
            %v1527 = vld [vmem:[%s1526] sm:$0x1]
            %s1528 = scalar_lea.vmem [#allocation3], %s1524
            %v1529 = vld [vmem:[%s1528] sm:$0x1]
            %1530 = vxpose.xlu0.b32.start [1/16] %v1527, 128
            %1531 = vxpose.xlu0.b32.cont [2/16] 0.0, 128
            %1532 = vxpose.xlu0.b32.cont [3/16] 0.0, 128
            %1533 = vxpose.xlu0.b32.cont [4/16] 0.0, 128
            %1534 = vxpose.xlu0.b32.cont [5/16] 0.0, 128
            %1535 = vxpose.xlu0.b32.cont [6/16] 0.0, 128
            %1536 = vxpose.xlu0.b32.cont [7/16] 0.0, 128
            %1537 = vxpose.xlu0.b32.cont [8/16] 0.0, 128
            %1538 = vxpose.xlu0.b32.cont [9/16] 0.0, 128
            %1539 = vxpose.xlu0.b32.cont [10/16] 0.0, 128
            %1540 = vxpose.xlu0.b32.cont [11/16] 0.0, 128
            %1541 = vxpose.xlu0.b32.cont [12/16] 0.0, 128
            %1542 = vxpose.xlu0.b32.cont [13/16] 0.0, 128
            %1543 = vxpose.xlu0.b32.cont [14/16] 0.0, 128
            %1544 = vxpose.xlu0.b32.cont [15/16] 0.0, 128
            %1545 = vxpose.xlu0.b32.end [16/16] 0.0, 128
            %v1546 = vpop.trf.xlu0
            %v1547 = vpop.trf.xlu0
            %v1548 = vpop.trf.xlu0
            %v1549 = vpop.trf.xlu0
            %v1550 = vpop.trf.xlu0
            %v1551 = vpop.trf.xlu0
            %v1552 = vpop.trf.xlu0
            %v1553 = vpop.trf.xlu0
            %v1554 = vpop.trf.xlu0
            %v1555 = vpop.trf.xlu0
            %v1556 = vpop.trf.xlu0
            %v1557 = vpop.trf.xlu0
            %v1558 = vpop.trf.xlu0
            %v1559 = vpop.trf.xlu0
            %v1560 = vpop.trf.xlu0
            %v1561 = vpop.trf.xlu0
            %vm1562 = vcmask 7168
            %v1564 = vsel %vm1562, %v1546, 0
            %v1567 = vsel %vm1562, %v1547, 0
            %v1570 = vsel %vm1562, %v1548, 0
            %v1573 = vsel %vm1562, %v1549, 0
            %v1576 = vsel %vm1562, %v1550, 0
            %v1579 = vsel %vm1562, %v1551, 0
            %v1582 = vsel %vm1562, %v1552, 0
            %v1585 = vsel %vm1562, %v1553, 0
            %v1588 = vsel %vm1562, %v1554, 0
            %v1591 = vsel %vm1562, %v1555, 0
            %v1594 = vsel %vm1562, %v1556, 0
            %v1597 = vsel %vm1562, %v1557, 0
            %v1600 = vsel %vm1562, %v1558, 0
            %v1603 = vsel %vm1562, %v1559, 0
            %v1606 = vsel %vm1562, %v1560, 0
            %v1609 = vsel %vm1562, %v1561, 0
            %v1612 = vsel %vm1487, %v1482, 0
            %1614 = vmatprep.subr.mxu0 0.0
            %1615 = vmatpush1.msra.mxu0 %v1612
            %1616 = vmatprep.subr.mxu0 0.0
            %1617 = vmatpush1.msra.mxu0 0.0
            %1618 = vmatprep.subr.mxu0 0.0
            %1619 = vmatpush1.msra.mxu0 0.0
            %1620 = vmatprep.subr.mxu0 0.0
            %1621 = vmatpush1.msra.mxu0 0.0
            %1622 = vmatprep.subr.mxu0 0.0
            %1623 = vmatpush1.msra.mxu0 0.0
            %1624 = vmatprep.subr.mxu0 0.0
            %1625 = vmatpush1.msra.mxu0 0.0
            %1626 = vmatprep.subr.mxu0 0.0
            %1627 = vmatpush1.msra.mxu0 0.0
            %1628 = vmatprep.subr.mxu0 0.0
            %1629 = vmatpush1.msra.mxu0 0.0
            %1630 = vmatprep.subr.mxu0 0.0
            %1631 = vmatpush1.msra.mxu0 0.0
            %1632 = vmatprep.subr.mxu0 0.0
            %1633 = vmatpush1.msra.mxu0 0.0
            %1634 = vmatprep.subr.mxu0 0.0
            %1635 = vmatpush1.msra.mxu0 0.0
            %1636 = vmatprep.subr.mxu0 0.0
            %1637 = vmatpush1.msra.mxu0 0.0
            %1638 = vmatprep.subr.mxu0 0.0
            %1639 = vmatpush1.msra.mxu0 0.0
            %1640 = vmatprep.subr.mxu0 0.0
            %1641 = vmatpush1.msra.mxu0 0.0
            %1642 = vmatprep.subr.mxu0 0.0
            %1643 = vmatpush1.msra.mxu0 0.0
            %1644 = vmatprep.subr.mxu0 0.0
            %1645 = vmatpush1.msra.mxu0 0.0
            %1646 = vmatprep.subr.mxu0 0.0
            %1647 = vmatpush1.msra.mxu0 0.0
            %1648 = vmatprep.subr.mxu0 0.0
            %1649 = vmatpush1.msra.mxu0 0.0
            %1650 = vmatprep.subr.mxu0 0.0
            %1651 = vmatpush1.msra.mxu0 0.0
            %1652 = vmatprep.subr.mxu0 0.0
            %1653 = vmatpush1.msra.mxu0 0.0
            %1654 = vmatprep.subr.mxu0 0.0
            %1655 = vmatpush1.msra.mxu0 0.0
            %1656 = vmatprep.subr.mxu0 0.0
            %1657 = vmatpush1.msra.mxu0 0.0
            %1658 = vmatprep.subr.mxu0 0.0
            %1659 = vmatpush1.msra.mxu0 0.0
            %1660 = vmatprep.subr.mxu0 0.0
            %1661 = vmatpush1.msra.mxu0 0.0
            %1662 = vmatprep.subr.mxu0 0.0
            %1663 = vmatpush1.msra.mxu0 0.0
            %1664 = vmatprep.subr.mxu0 0.0
            %1665 = vmatpush1.msra.mxu0 0.0
            %1666 = vmatprep.subr.mxu0 0.0
            %1667 = vmatpush1.msra.mxu0 0.0
            %1668 = vmatprep.subr.mxu0 0.0
            %1669 = vmatpush1.msra.mxu0 0.0
            %1670 = vmatprep.subr.mxu0 0.0
            %1671 = vmatpush1.msra.mxu0 0.0
            %1672 = vmatprep.subr.mxu0 0.0
            %1673 = vmatpush1.msra.mxu0 0.0
            %1674 = vmatprep.subr.mxu0 0.0
            %1675 = vmatpush1.msra.mxu0 0.0
            %1676 = vmatprep.subr.mxu0 0.0
            %1677 = vmatpush1.msra.mxu0 0.0
            %1678 = vmatprep.mubr.f32.mxu0 0.0
            %1679 = vmatmul.mubr.f32.gmra.mrb[0].mxu0 %v1564
            %v1680 = vpop.f32.mrb[0].mxu0
            %v1681 = vadd.f32 0.0, %v1680
            %v1682 = vpop.f32.mrb[0].mxu0
            %1683 = vmatprep.mubr.f32.mxu0 0.0
            %1684 = vmatmul.mubr.f32.gmra.mrb[0].mxu0 %v1567
            %v1685 = vpop.f32.mrb[0].mxu0
            %v1686 = vadd.f32 0.0, %v1685
            %v1687 = vpop.f32.mrb[0].mxu0
            %1688 = vmatprep.mubr.f32.mxu0 0.0
            %1689 = vmatmul.mubr.f32.gmra.mrb[0].mxu0 %v1570
            %v1690 = vpop.f32.mrb[0].mxu0
            %v1691 = vadd.f32 0.0, %v1690
            %v1692 = vpop.f32.mrb[0].mxu0
            %1693 = vmatprep.mubr.f32.mxu0 0.0
            %1694 = vmatmul.mubr.f32.gmra.mrb[0].mxu0 %v1573
            %v1695 = vpop.f32.mrb[0].mxu0
            %v1696 = vadd.f32 0.0, %v1695
            %v1697 = vpop.f32.mrb[0].mxu0
            %1698 = vmatprep.mubr.f32.mxu0 0.0
            %1699 = vmatmul.mubr.f32.gmra.mrb[0].mxu0 %v1576
            %v1700 = vpop.f32.mrb[0].mxu0
            %v1701 = vadd.f32 0.0, %v1700
            %v1702 = vpop.f32.mrb[0].mxu0
            %1703 = vmatprep.mubr.f32.mxu0 0.0
            %1704 = vmatmul.mubr.f32.gmra.mrb[0].mxu0 %v1579
            %v1705 = vpop.f32.mrb[0].mxu0
            %v1706 = vadd.f32 0.0, %v1705
            %v1707 = vpop.f32.mrb[0].mxu0
            %1708 = vmatprep.mubr.f32.mxu0 0.0
            %1709 = vmatmul.mubr.f32.gmra.mrb[0].mxu0 %v1582
            %v1710 = vpop.f32.mrb[0].mxu0
            %v1711 = vadd.f32 0.0, %v1710
            %v1712 = vpop.f32.mrb[0].mxu0
            %1713 = vmatprep.mubr.f32.mxu0 0.0
            %1714 = vmatmul.mubr.f32.gmra.mrb[0].mxu0 %v1585
            %v1715 = vpop.f32.mrb[0].mxu0
            %v1716 = vadd.f32 0.0, %v1715
            %v1717 = vpop.f32.mrb[0].mxu0
            %1718 = vmatprep.mubr.f32.mxu0 0.0
            %1719 = vmatmul.mubr.f32.gmra.mrb[0].mxu0 %v1588
            %v1720 = vpop.f32.mrb[0].mxu0
            %v1721 = vadd.f32 0.0, %v1720
            %v1722 = vpop.f32.mrb[0].mxu0
            %1723 = vmatprep.mubr.f32.mxu0 0.0
            %1724 = vmatmul.mubr.f32.gmra.mrb[0].mxu0 %v1591
            %v1725 = vpop.f32.mrb[0].mxu0
            %v1726 = vadd.f32 0.0, %v1725
            %v1727 = vpop.f32.mrb[0].mxu0
            %1728 = vmatprep.mubr.f32.mxu0 0.0
            %1729 = vmatmul.mubr.f32.gmra.mrb[0].mxu0 %v1594
            %v1730 = vpop.f32.mrb[0].mxu0
            %v1731 = vadd.f32 0.0, %v1730
            %v1732 = vpop.f32.mrb[0].mxu0
            %1733 = vmatprep.mubr.f32.mxu0 0.0
            %1734 = vmatmul.mubr.f32.gmra.mrb[0].mxu0 %v1597
            %v1735 = vpop.f32.mrb[0].mxu0
            %v1736 = vadd.f32 0.0, %v1735
            %v1737 = vpop.f32.mrb[0].mxu0
            %1738 = vmatprep.mubr.f32.mxu0 0.0
            %1739 = vmatmul.mubr.f32.gmra.mrb[0].mxu0 %v1600
            %v1740 = vpop.f32.mrb[0].mxu0
            %v1741 = vadd.f32 0.0, %v1740
            %v1742 = vpop.f32.mrb[0].mxu0
            %1743 = vmatprep.mubr.f32.mxu0 0.0
            %1744 = vmatmul.mubr.f32.gmra.mrb[0].mxu0 %v1603
            %v1745 = vpop.f32.mrb[0].mxu0
            %v1746 = vadd.f32 0.0, %v1745
            %v1747 = vpop.f32.mrb[0].mxu0
            %1748 = vmatprep.mubr.f32.mxu0 0.0
            %1749 = vmatmul.mubr.f32.gmra.mrb[0].mxu0 %v1606
            %v1750 = vpop.f32.mrb[0].mxu0
            %v1751 = vadd.f32 0.0, %v1750
            %v1752 = vpop.f32.mrb[0].mxu0
            %1753 = vmatprep.mubr.f32.mxu0 0.0
            %1754 = vmatmul.mubr.f32.gmra.mrb[0].mxu0 %v1609
            %v1755 = vpop.f32.mrb[0].mxu0
            %v1756 = vadd.f32 0.0, %v1755
            %v1757 = vpop.f32.mrb[0].mxu0
            %1758 = vdwg.mxu0
            %1759 = vxpose.xlu0.b32.start [1/16] %v1529, 128
            %1760 = vxpose.xlu0.b32.cont [2/16] 0.0, 128
            %1761 = vxpose.xlu0.b32.cont [3/16] 0.0, 128
            %1762 = vxpose.xlu0.b32.cont [4/16] 0.0, 128
            %1763 = vxpose.xlu0.b32.cont [5/16] 0.0, 128
            %1764 = vxpose.xlu0.b32.cont [6/16] 0.0, 128
            %1765 = vxpose.xlu0.b32.cont [7/16] 0.0, 128
            %1766 = vxpose.xlu0.b32.cont [8/16] 0.0, 128
            %1767 = vxpose.xlu0.b32.cont [9/16] 0.0, 128
            %1768 = vxpose.xlu0.b32.cont [10/16] 0.0, 128
            %1769 = vxpose.xlu0.b32.cont [11/16] 0.0, 128
            %1770 = vxpose.xlu0.b32.cont [12/16] 0.0, 128
            %1771 = vxpose.xlu0.b32.cont [13/16] 0.0, 128
            %1772 = vxpose.xlu0.b32.cont [14/16] 0.0, 128
            %1773 = vxpose.xlu0.b32.cont [15/16] 0.0, 128
            %1774 = vxpose.xlu0.b32.end [16/16] 0.0, 128
            %v1775 = vpop.trf.xlu0
            %v1776 = vpop.trf.xlu0
            %v1777 = vpop.trf.xlu0
            %v1778 = vpop.trf.xlu0
            %v1779 = vpop.trf.xlu0
            %v1780 = vpop.trf.xlu0
            %v1781 = vpop.trf.xlu0
            %v1782 = vpop.trf.xlu0
            %v1783 = vpop.trf.xlu0
            %v1784 = vpop.trf.xlu0
            %v1785 = vpop.trf.xlu0
            %v1786 = vpop.trf.xlu0
            %v1787 = vpop.trf.xlu0
            %v1788 = vpop.trf.xlu0
            %v1789 = vpop.trf.xlu0
            %v1790 = vpop.trf.xlu0
            %v1792 = vsel %vm1562, %v1775, 0
            %v1795 = vsel %vm1562, %v1776, 0
            %v1798 = vsel %vm1562, %v1777, 0
            %v1801 = vsel %vm1562, %v1778, 0
            %v1804 = vsel %vm1562, %v1779, 0
            %v1807 = vsel %vm1562, %v1780, 0
            %v1810 = vsel %vm1562, %v1781, 0
            %v1813 = vsel %vm1562, %v1782, 0
            %v1816 = vsel %vm1562, %v1783, 0
            %v1819 = vsel %vm1562, %v1784, 0
            %v1822 = vsel %vm1562, %v1785, 0
            %v1825 = vsel %vm1562, %v1786, 0
            %v1828 = vsel %vm1562, %v1787, 0
            %v1831 = vsel %vm1562, %v1788, 0
            %v1834 = vsel %vm1562, %v1789, 0
            %v1837 = vsel %vm1562, %v1790, 0
            %v1840 = vsel %vm1487, %v1484, 0
            %1842 = vmatprep.subr.mxu0 0.0
            %1843 = vmatpush1.msra.mxu0 %v1840
            %1844 = vmatprep.subr.mxu0 0.0
            %1845 = vmatpush1.msra.mxu0 0.0
            %1846 = vmatprep.subr.mxu0 0.0
            %1847 = vmatpush1.msra.mxu0 0.0
            %1848 = vmatprep.subr.mxu0 0.0
            %1849 = vmatpush1.msra.mxu0 0.0
            %1850 = vmatprep.subr.mxu0 0.0
            %1851 = vmatpush1.msra.mxu0 0.0
            %1852 = vmatprep.subr.mxu0 0.0
            %1853 = vmatpush1.msra.mxu0 0.0
            %1854 = vmatprep.subr.mxu0 0.0
            %1855 = vmatpush1.msra.mxu0 0.0
            %1856 = vmatprep.subr.mxu0 0.0
            %1857 = vmatpush1.msra.mxu0 0.0
            %1858 = vmatprep.subr.mxu0 0.0
            %1859 = vmatpush1.msra.mxu0 0.0
            %1860 = vmatprep.subr.mxu0 0.0
            %1861 = vmatpush1.msra.mxu0 0.0
            %1862 = vmatprep.subr.mxu0 0.0
            %1863 = vmatpush1.msra.mxu0 0.0
            %1864 = vmatprep.subr.mxu0 0.0
            %1865 = vmatpush1.msra.mxu0 0.0
            %1866 = vmatprep.subr.mxu0 0.0
            %1867 = vmatpush1.msra.mxu0 0.0
            %1868 = vmatprep.subr.mxu0 0.0
            %1869 = vmatpush1.msra.mxu0 0.0
            %1870 = vmatprep.subr.mxu0 0.0
            %1871 = vmatpush1.msra.mxu0 0.0
            %1872 = vmatprep.subr.mxu0 0.0
            %1873 = vmatpush1.msra.mxu0 0.0
            %1874 = vmatprep.subr.mxu0 0.0
            %1875 = vmatpush1.msra.mxu0 0.0
            %1876 = vmatprep.subr.mxu0 0.0
            %1877 = vmatpush1.msra.mxu0 0.0
            %1878 = vmatprep.subr.mxu0 0.0
            %1879 = vmatpush1.msra.mxu0 0.0
            %1880 = vmatprep.subr.mxu0 0.0
            %1881 = vmatpush1.msra.mxu0 0.0
            %1882 = vmatprep.subr.mxu0 0.0
            %1883 = vmatpush1.msra.mxu0 0.0
            %1884 = vmatprep.subr.mxu0 0.0
            %1885 = vmatpush1.msra.mxu0 0.0
            %1886 = vmatprep.subr.mxu0 0.0
            %1887 = vmatpush1.msra.mxu0 0.0
            %1888 = vmatprep.subr.mxu0 0.0
            %1889 = vmatpush1.msra.mxu0 0.0
            %1890 = vmatprep.subr.mxu0 0.0
            %1891 = vmatpush1.msra.mxu0 0.0
            %1892 = vmatprep.subr.mxu0 0.0
            %1893 = vmatpush1.msra.mxu0 0.0
            %1894 = vmatprep.subr.mxu0 0.0
            %1895 = vmatpush1.msra.mxu0 0.0
            %1896 = vmatprep.subr.mxu0 0.0
            %1897 = vmatpush1.msra.mxu0 0.0
            %1898 = vmatprep.subr.mxu0 0.0
            %1899 = vmatpush1.msra.mxu0 0.0
            %1900 = vmatprep.subr.mxu0 0.0
            %1901 = vmatpush1.msra.mxu0 0.0
            %1902 = vmatprep.subr.mxu0 0.0
            %1903 = vmatpush1.msra.mxu0 0.0
            %1904 = vmatprep.subr.mxu0 0.0
            %1905 = vmatpush1.msra.mxu0 0.0
            %1906 = vmatprep.mubr.f32.mxu0 0.0
            %1907 = vmatmul.mubr.f32.gmra.mrb[0].mxu0 %v1792
            %v1908 = vpop.f32.mrb[0].mxu0
            %v1909 = vadd.f32 0.0, %v1908
            %v1910 = vpop.f32.mrb[0].mxu0
            %1911 = vmatprep.mubr.f32.mxu0 0.0
            %1912 = vmatmul.mubr.f32.gmra.mrb[0].mxu0 %v1795
            %v1913 = vpop.f32.mrb[0].mxu0
            %v1914 = vadd.f32 0.0, %v1913
            %v1915 = vpop.f32.mrb[0].mxu0
            %1916 = vmatprep.mubr.f32.mxu0 0.0
            %1917 = vmatmul.mubr.f32.gmra.mrb[0].mxu0 %v1798
            %v1918 = vpop.f32.mrb[0].mxu0
            %v1919 = vadd.f32 0.0, %v1918
            %v1920 = vpop.f32.mrb[0].mxu0
            %1921 = vmatprep.mubr.f32.mxu0 0.0
            %1922 = vmatmul.mubr.f32.gmra.mrb[0].mxu0 %v1801
            %v1923 = vpop.f32.mrb[0].mxu0
            %v1924 = vadd.f32 0.0, %v1923
            %v1925 = vpop.f32.mrb[0].mxu0
            %1926 = vmatprep.mubr.f32.mxu0 0.0
            %1927 = vmatmul.mubr.f32.gmra.mrb[0].mxu0 %v1804
            %v1928 = vpop.f32.mrb[0].mxu0
            %v1929 = vadd.f32 0.0, %v1928
            %v1930 = vpop.f32.mrb[0].mxu0
            %1931 = vmatprep.mubr.f32.mxu0 0.0
            %1932 = vmatmul.mubr.f32.gmra.mrb[0].mxu0 %v1807
            %v1933 = vpop.f32.mrb[0].mxu0
            %v1934 = vadd.f32 0.0, %v1933
            %v1935 = vpop.f32.mrb[0].mxu0
            %1936 = vmatprep.mubr.f32.mxu0 0.0
            %1937 = vmatmul.mubr.f32.gmra.mrb[0].mxu0 %v1810
            %v1938 = vpop.f32.mrb[0].mxu0
            %v1939 = vadd.f32 0.0, %v1938
            %v1940 = vpop.f32.mrb[0].mxu0
            %1941 = vmatprep.mubr.f32.mxu0 0.0
            %1942 = vmatmul.mubr.f32.gmra.mrb[0].mxu0 %v1813
            %v1943 = vpop.f32.mrb[0].mxu0
            %v1944 = vadd.f32 0.0, %v1943
            %v1945 = vpop.f32.mrb[0].mxu0
            %1946 = vmatprep.mubr.f32.mxu0 0.0
            %1947 = vmatmul.mubr.f32.gmra.mrb[0].mxu0 %v1816
            %v1948 = vpop.f32.mrb[0].mxu0
            %v1949 = vadd.f32 0.0, %v1948
            %v1950 = vpop.f32.mrb[0].mxu0
            %1951 = vmatprep.mubr.f32.mxu0 0.0
            %1952 = vmatmul.mubr.f32.gmra.mrb[0].mxu0 %v1819
            %v1953 = vpop.f32.mrb[0].mxu0
            %v1954 = vadd.f32 0.0, %v1953
            %v1955 = vpop.f32.mrb[0].mxu0
            %1956 = vmatprep.mubr.f32.mxu0 0.0
            %1957 = vmatmul.mubr.f32.gmra.mrb[0].mxu0 %v1822
            %v1958 = vpop.f32.mrb[0].mxu0
            %v1959 = vadd.f32 0.0, %v1958
            %v1960 = vpop.f32.mrb[0].mxu0
            %1961 = vmatprep.mubr.f32.mxu0 0.0
            %1962 = vmatmul.mubr.f32.gmra.mrb[0].mxu0 %v1825
            %v1963 = vpop.f32.mrb[0].mxu0
            %v1964 = vadd.f32 0.0, %v1963
            %v1965 = vpop.f32.mrb[0].mxu0
            %1966 = vmatprep.mubr.f32.mxu0 0.0
            %1967 = vmatmul.mubr.f32.gmra.mrb[0].mxu0 %v1828
            %v1968 = vpop.f32.mrb[0].mxu0
            %v1969 = vadd.f32 0.0, %v1968
            %v1970 = vpop.f32.mrb[0].mxu0
            %1971 = vmatprep.mubr.f32.mxu0 0.0
            %1972 = vmatmul.mubr.f32.gmra.mrb[0].mxu0 %v1831
            %v1973 = vpop.f32.mrb[0].mxu0
            %v1974 = vadd.f32 0.0, %v1973
            %v1975 = vpop.f32.mrb[0].mxu0
            %1976 = vmatprep.mubr.f32.mxu0 0.0
            %1977 = vmatmul.mubr.f32.gmra.mrb[0].mxu0 %v1834
            %v1978 = vpop.f32.mrb[0].mxu0
            %v1979 = vadd.f32 0.0, %v1978
            %v1980 = vpop.f32.mrb[0].mxu0
            %1981 = vmatprep.mubr.f32.mxu0 0.0
            %1982 = vmatmul.mubr.f32.gmra.mrb[0].mxu0 %v1837
            %v1983 = vpop.f32.mrb[0].mxu0
            %v1984 = vadd.f32 0.0, %v1983
            %v1985 = vpop.f32.mrb[0].mxu0
            %1986 = vdwg.mxu0
            %v1987 = vsub.f32 %v1681, %v1909
            %v1988 = vsub.f32 %v1686, %v1914
            %v1989 = vsub.f32 %v1691, %v1919
            %v1990 = vsub.f32 %v1696, %v1924
            %v1991 = vsub.f32 %v1701, %v1929
            %v1992 = vsub.f32 %v1706, %v1934
            %v1993 = vsub.f32 %v1711, %v1939
            %v1994 = vsub.f32 %v1716, %v1944
            %v1995 = vsub.f32 %v1721, %v1949
            %v1996 = vsub.f32 %v1726, %v1954
            %v1997 = vsub.f32 %v1731, %v1959
            %v1998 = vsub.f32 %v1736, %v1964
            %v1999 = vsub.f32 %v1741, %v1969
            %v2000 = vsub.f32 %v1746, %v1974
            %v2001 = vsub.f32 %v1751, %v1979
            %v2002 = vsub.f32 %v1756, %v1984
            %v2003 = vmul.f32 %v1987, 0.005
            %v2004 = vmul.f32 %v1988, 0.005
            %v2005 = vmul.f32 %v1989, 0.005
            %v2006 = vmul.f32 %v1990, 0.005
            %v2007 = vmul.f32 %v1991, 0.005
            %v2008 = vmul.f32 %v1992, 0.005
            %v2009 = vmul.f32 %v1993, 0.005
            %v2010 = vmul.f32 %v1994, 0.005
            %v2011 = vmul.f32 %v1995, 0.005
            %v2012 = vmul.f32 %v1996, 0.005
            %v2013 = vmul.f32 %v1997, 0.005
            %v2014 = vmul.f32 %v1998, 0.005
            %v2015 = vmul.f32 %v1999, 0.005
            %v2016 = vmul.f32 %v2000, 0.005
            %v2017 = vmul.f32 %v2001, 0.005
            %v2018 = vmul.f32 %v2002, 0.005
            %v2019 = vsub.f32 %v1508, %v2003
            %v2020 = vsub.f32 %v1509, %v2004
            %v2021 = vsub.f32 %v1510, %v2005
            %v2022 = vsub.f32 %v1511, %v2006
            %v2023 = vsub.f32 %v1512, %v2007
            %v2024 = vsub.f32 %v1513, %v2008
            %v2025 = vsub.f32 %v1514, %v2009
            %v2026 = vsub.f32 %v1515, %v2010
            %v2027 = vsub.f32 %v1516, %v2011
            %v2028 = vsub.f32 %v1517, %v2012
            %v2029 = vsub.f32 %v1518, %v2013
            %v2030 = vsub.f32 %v1519, %v2014
            %v2031 = vsub.f32 %v1520, %v2015
            %v2032 = vsub.f32 %v1521, %v2016
            %v2033 = vsub.f32 %v1522, %v2017
            %v2034 = vsub.f32 %v1523, %v2018
            %v2035 = vmul.f32 %v2019, %v2019
            %v2036 = vmul.f32 %v2020, %v2020
            %v2037 = vmul.f32 %v2021, %v2021
            %v2038 = vmul.f32 %v2022, %v2022
            %v2039 = vmul.f32 %v2023, %v2023
            %v2040 = vmul.f32 %v2024, %v2024
            %v2041 = vmul.f32 %v2025, %v2025
            %v2042 = vmul.f32 %v2026, %v2026
            %v2043 = vmul.f32 %v2027, %v2027
            %v2044 = vmul.f32 %v2028, %v2028
            %v2045 = vmul.f32 %v2029, %v2029
            %v2046 = vmul.f32 %v2030, %v2030
            %v2047 = vmul.f32 %v2031, %v2031
            %v2048 = vmul.f32 %v2032, %v2032
            %v2049 = vmul.f32 %v2033, %v2033
            %v2050 = vmul.f32 %v2034, %v2034
            %v2051 = vadd.f32 %v2035, %v2036
            %v2052 = vadd.f32 %v2051, %v2037
            %v2053 = vadd.f32 %v2052, %v2038
            %v2054 = vadd.f32 %v2053, %v2039
            %v2055 = vadd.f32 %v2054, %v2040
            %v2056 = vadd.f32 %v2055, %v2041
            %v2057 = vadd.f32 %v2056, %v2042
            %v2058 = vadd.f32 %v2057, %v2043
            %v2059 = vadd.f32 %v2058, %v2044
            %v2060 = vadd.f32 %v2059, %v2045
            %v2061 = vadd.f32 %v2060, %v2046
            %v2062 = vadd.f32 %v2061, %v2047
            %v2063 = vadd.f32 %v2062, %v2048
            %v2064 = vadd.f32 %v2063, %v2049
            %v2065 = vadd.f32 %v2064, %v2050
            %2066 = vadd.xlane.f32.xlu0 %v2065
            %v2067 = vpop.xlane.xlu0 %2066
            %v2068 = vrot.slane %v2067, 4
            %v2069 = vadd.f32 %v2067, %v2068
            %v2070 = vrot.slane %v2069, 2
            %v2071 = vadd.f32 %v2069, %v2070
            %v2072 = vrot.slane %v2071, 1
            %v2073 = vadd.f32 %v2071, %v2072
            %s2074 = vtos %v2073
            %s2075 = sadd.f32 %s1505, %s2074
          $region49: #{tpu_custom_call.1} parent=43 // loop_footer
            %s1504 = sadd.s32 1, %s1500
          $region50: #{tpu_custom_call.1} parent=43 // loop_footer_branch
            %1499 = sbr.rel target = $region46
          $region51: #{tpu_custom_call.1} parent=43 // loop_exit
            _
          %s2076 = smul.f32 %s1505, 1.7125032e-10
          %s2077 = sadd.f32 %s1498, %s2076
          %v2078 = vstv %s2077
          %2079 = vst [vmem:[%s228] sm:$0x1] %v2078
        $region44: #{tpu_custom_call.1} parent=27 // pred_fallthru
          _
        %s2080 = sand.u32 %s94, 1
        %s2081 = scalar_lea.sflag [#allocation7], %s2080
        %s2082 = sand.u32 %s94, 1
        %s2083 = scalar_lea.vmem [#allocation10], %s2082
        // Predicated region
        $region52: #{tpu_custom_call.1} parent=27 // pred_check
          %p2084 = pneg %p104
        $region53: #{tpu_custom_call.1} parent=27 // pred_check_branch
          %2086 = sbr.rel (%p2084) target = $region55
        $region54: #{tpu_custom_call.1} parent=27 // pred_region
          %s2088 = ssub.s32 16, 16
          %2089 = vsyncadd %s2081, %s2088
          %s2090 = smul.addr %s26, 16
          %s2091 = scalar_lea.hbm %s2, %s2090
          %s2093 = sshll.u32 %s2083, 4
          %s2094 = int_to_ptr.vmem [resolvable:$true] %s2093
          %2096 = dma.vmem_to_hbm [thread:$0]  %s2094, 16, %s2091, %s2081
        $region55: #{tpu_custom_call.1} parent=27 // pred_fallthru
          _
      $region28: #{tpu_custom_call.1} parent=5 // pred_fallthru
        _
      %p2097 = scmp.le.s32.totalorder 2, %s17
      // Predicated region
      $region56: #{tpu_custom_call.1} parent=5 // pred_check
        %p2098 = pneg %p2097
      $region57: #{tpu_custom_call.1} parent=5 // pred_check_branch
        %2100 = sbr.rel (%p2098) target = $region59
      $region58: #{tpu_custom_call.1} parent=5 // pred_region
        %s2101 = ssub.s32 %s17, 2
        // Predicated region
        $region60: #{tpu_custom_call.1} parent=58 // pred_check
          %p2102 = pneg %p110
        $region61: #{tpu_custom_call.1} parent=58 // pred_check_branch
          %2104 = sbr.rel (%p2102) target = $region63
        $region62: #{tpu_custom_call.1} parent=58 // pred_region
          %s2105 = sand.u32 %s95, 1
          %s2106 = scalar_lea.sflag [#allocation7], %s2105
          %s2107 = sand.u32 %s95, 1
          %s2108 = scalar_lea.vmem [#allocation10], %s2107
          %2109 = dma.done %s2106, 16
        $region63: #{tpu_custom_call.1} parent=58 // pred_fallthru
          _
      $region59: #{tpu_custom_call.1} parent=5 // pred_fallthru
        _
    $region6: #{tpu_custom_call.1} parent=1 // loop_footer
      %s21 = sadd.s32 1, %s17
    $region7: #{tpu_custom_call.1} parent=1 // loop_footer_branch
      %16 = sbr.rel target = $region3
    $region8: #{tpu_custom_call.1} parent=1 // loop_exit
      _
    %2110 = vsyncpa [#allocation6], 1
    %s2111 = scalar_lea.sflag [#allocation6], 1
    %2112 = vsyncpa %s2111, 1
    %2113 = vsyncpa [#allocation9], 1
    %s2114 = scalar_lea.sflag [#allocation9], 1
    %2115 = vsyncpa %s2114, 1
    %2116 = vsyncpa [#allocation7], 1
    %s2117 = scalar_lea.sflag [#allocation7], 1
    %2118 = vsyncpa %s2117, 1

</llo_original>
